<compile_context>
chip_gen: v7x
topology: tpu7x:2x2x1
jax: 0.10.0
libtpu: 0.0.40
codegen_flags: <defaults>
</compile_context>

<pallas_src>
import jax
import jax.numpy as jnp
from jax import lax
from jax.experimental import pallas as pl
from jax.experimental.pallas import tpu as pltpu


def _gru_kernel(x_ref, h0_ref, p_ref, out_ref, feat_ref):
    B, H = h0_ref.shape
    F = feat_ref.shape[1]
    S = out_ref.shape[1] // H
    Din = x_ref.shape[1] // S
    H2, H3 = 2 * H, 3 * H

    x = x_ref[...]                                   # (B, S*Din), single tiny load
    h = h0_ref[...].astype(jnp.float32)              # (B, H)

    # Unpack the packed parameter buffer ONCE (loop-invariant, off the chain).
    w_ih = p_ref[0:Din, 0:H3]                        # (Din, 3H)  gates r|z|n
    w_hh_rz = p_ref[Din:Din + H, 0:H2]               # (H, 2H)
    w_hh_n = p_ref[Din:Din + H, H2:H3]               # (H, H)
    w_f = p_ref[Din:Din + H, H3:H3 + F]              # (H, F)
    b_i = p_ref[Din + H:Din + H + 1, 0:H3]           # (1, 3H) b_ih (+ b_hh for r,z)
    b_f = p_ref[Din + H:Din + H + 1, H3:H3 + F]      # (1, F)
    b_hn = p_ref[Din + H + 1:Din + H + 2, 0:H]       # (1, H)  b_hh_n (inside r*(.))

    hs = []
    for t in range(S):                               # S is small: static unroll
        # --- off the serial chain (independent of h; scheduler hoists/pipelines)
        x_t = x[:, t * Din:(t + 1) * Din]            # (B, Din)
        gi = jnp.dot(x_t, w_ih, preferred_element_type=jnp.float32) + b_i  # (B,3H)
        # --- on the serial chain
        gh_rz = jnp.dot(h, w_hh_rz, preferred_element_type=jnp.float32)    # (B,2H)
        gh_n = jnp.dot(h, w_hh_n, preferred_element_type=jnp.float32) + b_hn
        rz = jax.nn.sigmoid(gi[:, 0:H2] + gh_rz)     # one EUP pass for r and z
        r = rz[:, 0:H]                               # low lanes: ~free
        z = rz[:, H:H2]                              # hides under the tanh latency
        n = jnp.tanh(gi[:, H2:H3] + r * gh_n)
        h = (1.0 - z) * n + z * h
        hs.append(h)

    # One lane-dense slab store instead of S masked sub-128 stores.
    out_ref[...] = jnp.concatenate(hs, axis=1).astype(out_ref.dtype)   # (B, S*H)
    feat = jnp.dot(h, w_f, preferred_element_type=jnp.float32) + b_f
    feat_ref[...] = feat.astype(feat_ref.dtype)


@jax.jit
def motion_model_forward(isequence, itensor, params):
    """isequence: (B, S, Din) f32 (batch-first), itensor: (B, H) initial hidden.
    Returns (output (B, S, H), features (B, F))."""
    B, S, Din = isequence.shape
    H = itensor.shape[1]
    F = params["w_f"].shape[1]
    assert 3 * H + F <= 128, "packed parameter buffer assumes 3H + F <= 128 lanes"

    # Pack gate weights (torch GRU order r, z, n) along lanes.
    w_ih_p = jnp.concatenate([params["w_ih"][g] for g in range(3)], axis=1)  # (Din,3H)
    w_hh_p = jnp.concatenate([params["w_hh"][g] for g in range(3)], axis=1)  # (H,3H)
    b_ih = params["b_ih"].reshape(3, H)
    b_hh = params["b_hh"].reshape(3, H)
    # r/z gates: b_ih and b_hh are plain sums -> fold together.  n gate: b_hh_n
    # must stay inside the r*(.) coupling, so it is stored separately.
    b_i = jnp.concatenate([b_ih[0] + b_hh[0], b_ih[1] + b_hh[1], b_ih[2]])   # (3H,)

    # One lane-aligned packed parameter buffer -> a single input DMA.
    R = Din + H + 2
    P = jnp.zeros((R, 128), jnp.float32)
    P = P.at[0:Din, 0:3 * H].set(w_ih_p)
    P = P.at[Din:Din + H, 0:3 * H].set(w_hh_p)
    P = P.at[Din:Din + H, 3 * H:3 * H + F].set(params["w_f"])
    P = P.at[Din + H, 0:3 * H].set(b_i)
    P = P.at[Din + H, 3 * H:3 * H + F].set(params["b_f"].reshape(F))
    P = P.at[Din + H + 1, 0:H].set(b_hh[2])

    x2 = isequence.reshape(B, S * Din)   # free row-major bitcast, no relayout

    flops = 2 * S * B * (Din * 3 * H + H * 3 * H) + 2 * B * H * F
    transcendentals = 3 * S * B * H
    bytes_accessed = 4 * (B * S * Din + B * H + R * 128 + B * S * H + B * F)

    vmem = pl.BlockSpec(memory_space=pltpu.MemorySpace.VMEM)
    out_flat, features = pl.pallas_call(
        _gru_kernel,
        out_shape=(jax.ShapeDtypeStruct((B, S * H), jnp.float32),
                   jax.ShapeDtypeStruct((B, F), jnp.float32)),
        in_specs=[vmem, vmem, vmem],
        out_specs=(vmem, vmem),
        compiler_params=pltpu.CompilerParams(vmem_limit_bytes=16 * 1024 * 1024),
        cost_estimate=pl.CostEstimate(flops=flops,
                                      transcendentals=transcendentals,
                                      bytes_accessed=bytes_accessed),
    )(x2, itensor, P)

    output = out_flat.reshape(B, S, H)   # free: row-major (B, S*H) == (B, S, H)
    return output, features


def _reference_forward(isequence, itensor, params):
    """Pure-JAX reference (torch.nn.GRU semantics) for validation."""
    w_ih, w_hh = params["w_ih"], params["w_hh"]
    b_ih, b_hh = params["b_ih"], params["b_hh"]

    def step(h, x):
        gi_r = x @ w_ih[0] + b_ih[0]
        gi_z = x @ w_ih[1] + b_ih[1]
        gi_n = x @ w_ih[2] + b_ih[2]
        gh_r = h @ w_hh[0] + b_hh[0]
        gh_z = h @ w_hh[1] + b_hh[1]
        gh_n = h @ w_hh[2] + b_hh[2]
        r = jax.nn.sigmoid(gi_r + gh_r)
        z = jax.nn.sigmoid(gi_z + gh_z)
        n = jnp.tanh(gi_n + r * gh_n)
        h_new = (1.0 - z) * n + z * h
        return h_new, h_new

    x_tmajor = jnp.transpose(isequence, (1, 0, 2))
    h_last, hs = lax.scan(step, itensor, x_tmajor)
    output = jnp.transpose(hs, (1, 0, 2))
    features = h_last @ params["w_f"] + params["b_f"]
    return output, features


if __name__ == "__main__":
    # Small shapes consistent with the module: input_dim=16, rnn_hdim=32, feature_dim=16
    B, S, Din, H, F = 8, 6, 16, 32, 16

    key = jax.random.PRNGKey(0)
    k = iter(jax.random.split(key, 10))

    params = {
        "w_ih": 0.1 * jax.random.normal(next(k), (3, Din, H), jnp.float32),
        "w_hh": 0.1 * jax.random.normal(next(k), (3, H, H), jnp.float32),
        "b_ih": 0.1 * jax.random.normal(next(k), (3, 1, H), jnp.float32),
        "b_hh": 0.1 * jax.random.normal(next(k), (3, 1, H), jnp.float32),
        "w_f":  0.1 * jax.random.normal(next(k), (H, F), jnp.float32),
        "b_f":  0.1 * jax.random.normal(next(k), (1, F), jnp.float32),
    }

    isequence = jax.random.normal(next(k), (B, S, Din), jnp.float32)
    itensor = jax.random.normal(next(k), (B, H), jnp.float32)  # initial hidden

    output, features = motion_model_forward(isequence, itensor, params)
    jax.block_until_ready((output, features))

    ref_out, ref_feat = _reference_forward(isequence, itensor, params)
    assert jnp.allclose(output, ref_out, atol=1e-5, rtol=1e-5), "output mismatch"
    assert jnp.allclose(features, ref_feat, atol=1e-5, rtol=1e-5), "features mismatch"

    print("KERNEL_OK")
</pallas_src>

<mosaic_0001>
module attributes {stable_mosaic.version = 11 : i64} {
  func.func @_gru_kernel(%arg0: memref<8x96xf32, #tpu.memory_space<vmem>>, %arg1: memref<8x32xf32, #tpu.memory_space<vmem>>, %arg2: memref<50x128xf32, #tpu.memory_space<vmem>>, %arg3: memref<8x192xf32, #tpu.memory_space<vmem>>, %arg4: memref<8x16xf32, #tpu.memory_space<vmem>>) attributes {dimension_semantics = [], scalar_prefetch = 0 : i64, scratch_operands = 0 : i64, tpu.core_type = #tpu.core_type<tc>} {
    %c0 = arith.constant 0 : index
    %c0_0 = arith.constant 0 : index
    %0 = vector.load %arg0[%c0, %c0_0] : memref<8x96xf32, #tpu.memory_space<vmem>>, vector<8x96xf32>
    %c0_1 = arith.constant 0 : index
    %c0_2 = arith.constant 0 : index
    %1 = vector.load %arg1[%c0_1, %c0_2] : memref<8x32xf32, #tpu.memory_space<vmem>>, vector<8x32xf32>
    %c0_3 = arith.constant 0 : index
    %c0_4 = arith.constant 0 : index
    %2 = vector.load %arg2[%c0_3, %c0_4] : memref<50x128xf32, #tpu.memory_space<vmem>>, vector<16x96xf32>
    %c16 = arith.constant 16 : index
    %c0_5 = arith.constant 0 : index
    %3 = vector.load %arg2[%c16, %c0_5] : memref<50x128xf32, #tpu.memory_space<vmem>>, vector<32x64xf32>
    %c16_6 = arith.constant 16 : index
    %c64 = arith.constant 64 : index
    %4 = vector.load %arg2[%c16_6, %c64] : memref<50x128xf32, #tpu.memory_space<vmem>>, vector<32x32xf32>
    %c16_7 = arith.constant 16 : index
    %c96 = arith.constant 96 : index
    %5 = vector.load %arg2[%c16_7, %c96] : memref<50x128xf32, #tpu.memory_space<vmem>>, vector<32x16xf32>
    %c48 = arith.constant 48 : index
    %c0_8 = arith.constant 0 : index
    %6 = vector.load %arg2[%c48, %c0_8] : memref<50x128xf32, #tpu.memory_space<vmem>>, vector<1x96xf32>
    %c48_9 = arith.constant 48 : index
    %c96_10 = arith.constant 96 : index
    %7 = vector.load %arg2[%c48_9, %c96_10] : memref<50x128xf32, #tpu.memory_space<vmem>>, vector<1x16xf32>
    %c49 = arith.constant 49 : index
    %c0_11 = arith.constant 0 : index
    %8 = vector.load %arg2[%c49, %c0_11] : memref<50x128xf32, #tpu.memory_space<vmem>>, vector<1x32xf32>
    %9 = vector.extract_strided_slice %0 {offsets = [0, 0], sizes = [8, 16], strides = [1, 1]} : vector<8x96xf32> to vector<8x16xf32>
    %cst = arith.constant dense<0.000000e+00> : vector<8x96xf32>
    %10 = tpu.matmul %9, %2, %cst {dimension_numbers = #tpu.dot_dimension_numbers<[1], [0], [0], [1], [0, 0, 1, 1], [], []>} : vector<8x16xf32>, vector<16x96xf32>, vector<8x96xf32> -> vector<8x96xf32>
    %11 = vector.broadcast %6 : vector<1x96xf32> to vector<8x96xf32>
    %12 = arith.addf %10, %11 : vector<8x96xf32>
    %cst_12 = arith.constant dense<0.000000e+00> : vector<8x64xf32>
    %13 = tpu.matmul %1, %3, %cst_12 {dimension_numbers = #tpu.dot_dimension_numbers<[1], [0], [0], [1], [0, 0, 1, 1], [], []>} : vector<8x32xf32>, vector<32x64xf32>, vector<8x64xf32> -> vector<8x64xf32>
    %cst_13 = arith.constant dense<0.000000e+00> : vector<8x32xf32>
    %14 = tpu.matmul %1, %4, %cst_13 {dimension_numbers = #tpu.dot_dimension_numbers<[1], [0], [0], [1], [0, 0, 1, 1], [], []>} : vector<8x32xf32>, vector<32x32xf32>, vector<8x32xf32> -> vector<8x32xf32>
    %15 = vector.broadcast %8 : vector<1x32xf32> to vector<8x32xf32>
    %16 = arith.addf %14, %15 : vector<8x32xf32>
    %17 = vector.extract_strided_slice %12 {offsets = [0, 0], sizes = [8, 64], strides = [1, 1]} : vector<8x96xf32> to vector<8x64xf32>
    %18 = arith.addf %17, %13 : vector<8x64xf32>
    %19 = arith.negf %18 : vector<8x64xf32>
    %20 = math.exp %19 : vector<8x64xf32>
    %cst_14 = arith.constant 1.000000e+00 : f32
    %21 = vector.broadcast %cst_14 : f32 to vector<8x64xf32>
    %22 = arith.addf %21, %20 : vector<8x64xf32>
    %23 = arith.divf %21, %22 : vector<8x64xf32>
    %24 = vector.extract_strided_slice %23 {offsets = [0, 0], sizes = [8, 32], strides = [1, 1]} : vector<8x64xf32> to vector<8x32xf32>
    %25 = vector.extract_strided_slice %23 {offsets = [0, 32], sizes = [8, 32], strides = [1, 1]} : vector<8x64xf32> to vector<8x32xf32>
    %26 = vector.extract_strided_slice %12 {offsets = [0, 64], sizes = [8, 32], strides = [1, 1]} : vector<8x96xf32> to vector<8x32xf32>
    %27 = arith.mulf %24, %16 : vector<8x32xf32>
    %28 = arith.addf %26, %27 : vector<8x32xf32>
    %29 = math.tanh %28 : vector<8x32xf32>
    %cst_15 = arith.constant 1.000000e+00 : f32
    %30 = vector.broadcast %cst_15 : f32 to vector<8x32xf32>
    %31 = arith.subf %30, %25 : vector<8x32xf32>
    %32 = arith.mulf %31, %29 : vector<8x32xf32>
    %33 = arith.mulf %25, %1 : vector<8x32xf32>
    %34 = arith.addf %32, %33 : vector<8x32xf32>
    %35 = vector.extract_strided_slice %0 {offsets = [0, 16], sizes = [8, 16], strides = [1, 1]} : vector<8x96xf32> to vector<8x16xf32>
    %cst_16 = arith.constant dense<0.000000e+00> : vector<8x96xf32>
    %36 = tpu.matmul %35, %2, %cst_16 {dimension_numbers = #tpu.dot_dimension_numbers<[1], [0], [0], [1], [0, 0, 1, 1], [], []>} : vector<8x16xf32>, vector<16x96xf32>, vector<8x96xf32> -> vector<8x96xf32>
    %37 = vector.broadcast %6 : vector<1x96xf32> to vector<8x96xf32>
    %38 = arith.addf %36, %37 : vector<8x96xf32>
    %cst_17 = arith.constant dense<0.000000e+00> : vector<8x64xf32>
    %39 = tpu.matmul %34, %3, %cst_17 {dimension_numbers = #tpu.dot_dimension_numbers<[1], [0], [0], [1], [0, 0, 1, 1], [], []>} : vector<8x32xf32>, vector<32x64xf32>, vector<8x64xf32> -> vector<8x64xf32>
    %cst_18 = arith.constant dense<0.000000e+00> : vector<8x32xf32>
    %40 = tpu.matmul %34, %4, %cst_18 {dimension_numbers = #tpu.dot_dimension_numbers<[1], [0], [0], [1], [0, 0, 1, 1], [], []>} : vector<8x32xf32>, vector<32x32xf32>, vector<8x32xf32> -> vector<8x32xf32>
    %41 = vector.broadcast %8 : vector<1x32xf32> to vector<8x32xf32>
    %42 = arith.addf %40, %41 : vector<8x32xf32>
    %43 = vector.extract_strided_slice %38 {offsets = [0, 0], sizes = [8, 64], strides = [1, 1]} : vector<8x96xf32> to vector<8x64xf32>
    %44 = arith.addf %43, %39 : vector<8x64xf32>
    %45 = arith.negf %44 : vector<8x64xf32>
    %46 = math.exp %45 : vector<8x64xf32>
    %cst_19 = arith.constant 1.000000e+00 : f32
    %47 = vector.broadcast %cst_19 : f32 to vector<8x64xf32>
    %48 = arith.addf %47, %46 : vector<8x64xf32>
    %49 = arith.divf %47, %48 : vector<8x64xf32>
    %50 = vector.extract_strided_slice %49 {offsets = [0, 0], sizes = [8, 32], strides = [1, 1]} : vector<8x64xf32> to vector<8x32xf32>
    %51 = vector.extract_strided_slice %49 {offsets = [0, 32], sizes = [8, 32], strides = [1, 1]} : vector<8x64xf32> to vector<8x32xf32>
    %52 = vector.extract_strided_slice %38 {offsets = [0, 64], sizes = [8, 32], strides = [1, 1]} : vector<8x96xf32> to vector<8x32xf32>
    %53 = arith.mulf %50, %42 : vector<8x32xf32>
    %54 = arith.addf %52, %53 : vector<8x32xf32>
    %55 = math.tanh %54 : vector<8x32xf32>
    %cst_20 = arith.constant 1.000000e+00 : f32
    %56 = vector.broadcast %cst_20 : f32 to vector<8x32xf32>
    %57 = arith.subf %56, %51 : vector<8x32xf32>
    %58 = arith.mulf %57, %55 : vector<8x32xf32>
    %59 = arith.mulf %51, %34 : vector<8x32xf32>
    %60 = arith.addf %58, %59 : vector<8x32xf32>
    %61 = vector.extract_strided_slice %0 {offsets = [0, 32], sizes = [8, 16], strides = [1, 1]} : vector<8x96xf32> to vector<8x16xf32>
    %cst_21 = arith.constant dense<0.000000e+00> : vector<8x96xf32>
    %62 = tpu.matmul %61, %2, %cst_21 {dimension_numbers = #tpu.dot_dimension_numbers<[1], [0], [0], [1], [0, 0, 1, 1], [], []>} : vector<8x16xf32>, vector<16x96xf32>, vector<8x96xf32> -> vector<8x96xf32>
    %63 = vector.broadcast %6 : vector<1x96xf32> to vector<8x96xf32>
    %64 = arith.addf %62, %63 : vector<8x96xf32>
    %cst_22 = arith.constant dense<0.000000e+00> : vector<8x64xf32>
    %65 = tpu.matmul %60, %3, %cst_22 {dimension_numbers = #tpu.dot_dimension_numbers<[1], [0], [0], [1], [0, 0, 1, 1], [], []>} : vector<8x32xf32>, vector<32x64xf32>, vector<8x64xf32> -> vector<8x64xf32>
    %cst_23 = arith.constant dense<0.000000e+00> : vector<8x32xf32>
    %66 = tpu.matmul %60, %4, %cst_23 {dimension_numbers = #tpu.dot_dimension_numbers<[1], [0], [0], [1], [0, 0, 1, 1], [], []>} : vector<8x32xf32>, vector<32x32xf32>, vector<8x32xf32> -> vector<8x32xf32>
    %67 = vector.broadcast %8 : vector<1x32xf32> to vector<8x32xf32>
    %68 = arith.addf %66, %67 : vector<8x32xf32>
    %69 = vector.extract_strided_slice %64 {offsets = [0, 0], sizes = [8, 64], strides = [1, 1]} : vector<8x96xf32> to vector<8x64xf32>
    %70 = arith.addf %69, %65 : vector<8x64xf32>
    %71 = arith.negf %70 : vector<8x64xf32>
    %72 = math.exp %71 : vector<8x64xf32>
    %cst_24 = arith.constant 1.000000e+00 : f32
    %73 = vector.broadcast %cst_24 : f32 to vector<8x64xf32>
    %74 = arith.addf %73, %72 : vector<8x64xf32>
    %75 = arith.divf %73, %74 : vector<8x64xf32>
    %76 = vector.extract_strided_slice %75 {offsets = [0, 0], sizes = [8, 32], strides = [1, 1]} : vector<8x64xf32> to vector<8x32xf32>
    %77 = vector.extract_strided_slice %75 {offsets = [0, 32], sizes = [8, 32], strides = [1, 1]} : vector<8x64xf32> to vector<8x32xf32>
    %78 = vector.extract_strided_slice %64 {offsets = [0, 64], sizes = [8, 32], strides = [1, 1]} : vector<8x96xf32> to vector<8x32xf32>
    %79 = arith.mulf %76, %68 : vector<8x32xf32>
    %80 = arith.addf %78, %79 : vector<8x32xf32>
    %81 = math.tanh %80 : vector<8x32xf32>
    %cst_25 = arith.constant 1.000000e+00 : f32
    %82 = vector.broadcast %cst_25 : f32 to vector<8x32xf32>
    %83 = arith.subf %82, %77 : vector<8x32xf32>
    %84 = arith.mulf %83, %81 : vector<8x32xf32>
    %85 = arith.mulf %77, %60 : vector<8x32xf32>
    %86 = arith.addf %84, %85 : vector<8x32xf32>
    %87 = vector.extract_strided_slice %0 {offsets = [0, 48], sizes = [8, 16], strides = [1, 1]} : vector<8x96xf32> to vector<8x16xf32>
    %cst_26 = arith.constant dense<0.000000e+00> : vector<8x96xf32>
    %88 = tpu.matmul %87, %2, %cst_26 {dimension_numbers = #tpu.dot_dimension_numbers<[1], [0], [0], [1], [0, 0, 1, 1], [], []>} : vector<8x16xf32>, vector<16x96xf32>, vector<8x96xf32> -> vector<8x96xf32>
    %89 = vector.broadcast %6 : vector<1x96xf32> to vector<8x96xf32>
    %90 = arith.addf %88, %89 : vector<8x96xf32>
    %cst_27 = arith.constant dense<0.000000e+00> : vector<8x64xf32>
    %91 = tpu.matmul %86, %3, %cst_27 {dimension_numbers = #tpu.dot_dimension_numbers<[1], [0], [0], [1], [0, 0, 1, 1], [], []>} : vector<8x32xf32>, vector<32x64xf32>, vector<8x64xf32> -> vector<8x64xf32>
    %cst_28 = arith.constant dense<0.000000e+00> : vector<8x32xf32>
    %92 = tpu.matmul %86, %4, %cst_28 {dimension_numbers = #tpu.dot_dimension_numbers<[1], [0], [0], [1], [0, 0, 1, 1], [], []>} : vector<8x32xf32>, vector<32x32xf32>, vector<8x32xf32> -> vector<8x32xf32>
    %93 = vector.broadcast %8 : vector<1x32xf32> to vector<8x32xf32>
    %94 = arith.addf %92, %93 : vector<8x32xf32>
    %95 = vector.extract_strided_slice %90 {offsets = [0, 0], sizes = [8, 64], strides = [1, 1]} : vector<8x96xf32> to vector<8x64xf32>
    %96 = arith.addf %95, %91 : vector<8x64xf32>
    %97 = arith.negf %96 : vector<8x64xf32>
    %98 = math.exp %97 : vector<8x64xf32>
    %cst_29 = arith.constant 1.000000e+00 : f32
    %99 = vector.broadcast %cst_29 : f32 to vector<8x64xf32>
    %100 = arith.addf %99, %98 : vector<8x64xf32>
    %101 = arith.divf %99, %100 : vector<8x64xf32>
    %102 = vector.extract_strided_slice %101 {offsets = [0, 0], sizes = [8, 32], strides = [1, 1]} : vector<8x64xf32> to vector<8x32xf32>
    %103 = vector.extract_strided_slice %101 {offsets = [0, 32], sizes = [8, 32], strides = [1, 1]} : vector<8x64xf32> to vector<8x32xf32>
    %104 = vector.extract_strided_slice %90 {offsets = [0, 64], sizes = [8, 32], strides = [1, 1]} : vector<8x96xf32> to vector<8x32xf32>
    %105 = arith.mulf %102, %94 : vector<8x32xf32>
    %106 = arith.addf %104, %105 : vector<8x32xf32>
    %107 = math.tanh %106 : vector<8x32xf32>
    %cst_30 = arith.constant 1.000000e+00 : f32
    %108 = vector.broadcast %cst_30 : f32 to vector<8x32xf32>
    %109 = arith.subf %108, %103 : vector<8x32xf32>
    %110 = arith.mulf %109, %107 : vector<8x32xf32>
    %111 = arith.mulf %103, %86 : vector<8x32xf32>
    %112 = arith.addf %110, %111 : vector<8x32xf32>
    %113 = vector.extract_strided_slice %0 {offsets = [0, 64], sizes = [8, 16], strides = [1, 1]} : vector<8x96xf32> to vector<8x16xf32>
    %cst_31 = arith.constant dense<0.000000e+00> : vector<8x96xf32>
    %114 = tpu.matmul %113, %2, %cst_31 {dimension_numbers = #tpu.dot_dimension_numbers<[1], [0], [0], [1], [0, 0, 1, 1], [], []>} : vector<8x16xf32>, vector<16x96xf32>, vector<8x96xf32> -> vector<8x96xf32>
    %115 = vector.broadcast %6 : vector<1x96xf32> to vector<8x96xf32>
    %116 = arith.addf %114, %115 : vector<8x96xf32>
    %cst_32 = arith.constant dense<0.000000e+00> : vector<8x64xf32>
    %117 = tpu.matmul %112, %3, %cst_32 {dimension_numbers = #tpu.dot_dimension_numbers<[1], [0], [0], [1], [0, 0, 1, 1], [], []>} : vector<8x32xf32>, vector<32x64xf32>, vector<8x64xf32> -> vector<8x64xf32>
    %cst_33 = arith.constant dense<0.000000e+00> : vector<8x32xf32>
    %118 = tpu.matmul %112, %4, %cst_33 {dimension_numbers = #tpu.dot_dimension_numbers<[1], [0], [0], [1], [0, 0, 1, 1], [], []>} : vector<8x32xf32>, vector<32x32xf32>, vector<8x32xf32> -> vector<8x32xf32>
    %119 = vector.broadcast %8 : vector<1x32xf32> to vector<8x32xf32>
    %120 = arith.addf %118, %119 : vector<8x32xf32>
    %121 = vector.extract_strided_slice %116 {offsets = [0, 0], sizes = [8, 64], strides = [1, 1]} : vector<8x96xf32> to vector<8x64xf32>
    %122 = arith.addf %121, %117 : vector<8x64xf32>
    %123 = arith.negf %122 : vector<8x64xf32>
    %124 = math.exp %123 : vector<8x64xf32>
    %cst_34 = arith.constant 1.000000e+00 : f32
    %125 = vector.broadcast %cst_34 : f32 to vector<8x64xf32>
    %126 = arith.addf %125, %124 : vector<8x64xf32>
    %127 = arith.divf %125, %126 : vector<8x64xf32>
    %128 = vector.extract_strided_slice %127 {offsets = [0, 0], sizes = [8, 32], strides = [1, 1]} : vector<8x64xf32> to vector<8x32xf32>
    %129 = vector.extract_strided_slice %127 {offsets = [0, 32], sizes = [8, 32], strides = [1, 1]} : vector<8x64xf32> to vector<8x32xf32>
    %130 = vector.extract_strided_slice %116 {offsets = [0, 64], sizes = [8, 32], strides = [1, 1]} : vector<8x96xf32> to vector<8x32xf32>
    %131 = arith.mulf %128, %120 : vector<8x32xf32>
    %132 = arith.addf %130, %131 : vector<8x32xf32>
    %133 = math.tanh %132 : vector<8x32xf32>
    %cst_35 = arith.constant 1.000000e+00 : f32
    %134 = vector.broadcast %cst_35 : f32 to vector<8x32xf32>
    %135 = arith.subf %134, %129 : vector<8x32xf32>
    %136 = arith.mulf %135, %133 : vector<8x32xf32>
    %137 = arith.mulf %129, %112 : vector<8x32xf32>
    %138 = arith.addf %136, %137 : vector<8x32xf32>
    %139 = vector.extract_strided_slice %0 {offsets = [0, 80], sizes = [8, 16], strides = [1, 1]} : vector<8x96xf32> to vector<8x16xf32>
    %cst_36 = arith.constant dense<0.000000e+00> : vector<8x96xf32>
    %140 = tpu.matmul %139, %2, %cst_36 {dimension_numbers = #tpu.dot_dimension_numbers<[1], [0], [0], [1], [0, 0, 1, 1], [], []>} : vector<8x16xf32>, vector<16x96xf32>, vector<8x96xf32> -> vector<8x96xf32>
    %141 = vector.broadcast %6 : vector<1x96xf32> to vector<8x96xf32>
    %142 = arith.addf %140, %141 : vector<8x96xf32>
    %cst_37 = arith.constant dense<0.000000e+00> : vector<8x64xf32>
    %143 = tpu.matmul %138, %3, %cst_37 {dimension_numbers = #tpu.dot_dimension_numbers<[1], [0], [0], [1], [0, 0, 1, 1], [], []>} : vector<8x32xf32>, vector<32x64xf32>, vector<8x64xf32> -> vector<8x64xf32>
    %cst_38 = arith.constant dense<0.000000e+00> : vector<8x32xf32>
    %144 = tpu.matmul %138, %4, %cst_38 {dimension_numbers = #tpu.dot_dimension_numbers<[1], [0], [0], [1], [0, 0, 1, 1], [], []>} : vector<8x32xf32>, vector<32x32xf32>, vector<8x32xf32> -> vector<8x32xf32>
    %145 = vector.broadcast %8 : vector<1x32xf32> to vector<8x32xf32>
    %146 = arith.addf %144, %145 : vector<8x32xf32>
    %147 = vector.extract_strided_slice %142 {offsets = [0, 0], sizes = [8, 64], strides = [1, 1]} : vector<8x96xf32> to vector<8x64xf32>
    %148 = arith.addf %147, %143 : vector<8x64xf32>
    %149 = arith.negf %148 : vector<8x64xf32>
    %150 = math.exp %149 : vector<8x64xf32>
    %cst_39 = arith.constant 1.000000e+00 : f32
    %151 = vector.broadcast %cst_39 : f32 to vector<8x64xf32>
    %152 = arith.addf %151, %150 : vector<8x64xf32>
    %153 = arith.divf %151, %152 : vector<8x64xf32>
    %154 = vector.extract_strided_slice %153 {offsets = [0, 0], sizes = [8, 32], strides = [1, 1]} : vector<8x64xf32> to vector<8x32xf32>
    %155 = vector.extract_strided_slice %153 {offsets = [0, 32], sizes = [8, 32], strides = [1, 1]} : vector<8x64xf32> to vector<8x32xf32>
    %156 = vector.extract_strided_slice %142 {offsets = [0, 64], sizes = [8, 32], strides = [1, 1]} : vector<8x96xf32> to vector<8x32xf32>
    %157 = arith.mulf %154, %146 : vector<8x32xf32>
    %158 = arith.addf %156, %157 : vector<8x32xf32>
    %159 = math.tanh %158 : vector<8x32xf32>
    %cst_40 = arith.constant 1.000000e+00 : f32
    %160 = vector.broadcast %cst_40 : f32 to vector<8x32xf32>
    %161 = arith.subf %160, %155 : vector<8x32xf32>
    %162 = arith.mulf %161, %159 : vector<8x32xf32>
    %163 = arith.mulf %155, %138 : vector<8x32xf32>
    %164 = arith.addf %162, %163 : vector<8x32xf32>
    %165 = tpu.concatenate %34, %60, %86, %112, %138, %164 in 1 : vector<8x32xf32>, vector<8x32xf32>, vector<8x32xf32>, vector<8x32xf32>, vector<8x32xf32>, vector<8x32xf32> -> vector<8x192xf32>
    %c0_41 = arith.constant 0 : index
    %c0_42 = arith.constant 0 : index
    %166 = vector.load %arg3[%c0_41, %c0_42] : memref<8x192xf32, #tpu.memory_space<vmem>>, vector<8x192xf32>
    tpu.vector_store %arg3[%c0_41, %c0_42], %165 {strides = array<i32>} : memref<8x192xf32, #tpu.memory_space<vmem>>, vector<8x192xf32>,
    %cst_43 = arith.constant dense<0.000000e+00> : vector<8x16xf32>
    %167 = tpu.matmul %164, %5, %cst_43 {dimension_numbers = #tpu.dot_dimension_numbers<[1], [0], [0], [1], [0, 0, 1, 1], [], []>} : vector<8x32xf32>, vector<32x16xf32>, vector<8x16xf32> -> vector<8x16xf32>
    %168 = vector.broadcast %7 : vector<1x16xf32> to vector<8x16xf32>
    %169 = arith.addf %167, %168 : vector<8x16xf32>
    %c0_44 = arith.constant 0 : index
    %c0_45 = arith.constant 0 : index
    %170 = vector.load %arg4[%c0_44, %c0_45] : memref<8x16xf32, #tpu.memory_space<vmem>>, vector<8x16xf32>
    tpu.vector_store %arg4[%c0_44, %c0_45], %169 {strides = array<i32>} : memref<8x16xf32, #tpu.memory_space<vmem>>, vector<8x16xf32>,
    return
  }
}

</mosaic_0001>

<llo_original>
// kernel: motion_model_forward.1
$region0: #{motion_model_forward.1}
  #allocation0 [shape = 'u32[]', space=smem, size = 0x4, offset = 0x4, fixed_abs, tag = 'smem constant byte address 0x4 - core index']
  #allocation1 [shape = 'u32[144,128]{1,0:T(1,128)}', space=vmem, size = 0x12000, scoped, tag = 'internal scratch']
  %s0 = inlined_call_operand.vmem [shape: f32[8,96], index: 0, kind: input, shape index: {}]
  %s1 = inlined_call_operand.vmem [shape: f32[8,32], index: 1, kind: input, shape index: {}]
  %s2 = inlined_call_operand.vmem [shape: f32[50,128], index: 2, kind: input, shape index: {}]
  %s3 = inlined_call_operand.vmem [shape: f32[8,192], index: 3, kind: output, shape index: {0}]
  %s4 = inlined_call_operand.hbm [shape: f32[8,16], index: 4, kind: output, shape index: {1}]
  %5 = xla_tuple %s3, %s4
  %s6 = sld [smem:[#allocation0]]
  $region30: #{motion_model_forward.1} parent=0
    _
  %s8 = ssub.s32 1, %s6
  %s9 = scalar_select 0, %s8, %s6
  $region1: #{motion_model_forward.1} parent=0
    #allocation2 [shape = 'u8[4096]{0}', space=vmem, size = 0x1000, scoped, tag = 'output window, operand 1, single buffered']
    #allocation3 [shape = 's32[1]{0}', space=sflag, size = 0x4, scoped, tag = 'scoped memory for motion_model_forward.1']
    %10 = vsyncpa [#allocation3], 0
    // Predicated region
    $region2: #{motion_model_forward.1} parent=1 // pred_check
      _
    $region3: #{motion_model_forward.1} parent=1 // pred_check_branch
      %12 = sbr.rel (0) target = $region5
    $region4: #{motion_model_forward.1} parent=1 // pred_region
      _
    $region5: #{motion_model_forward.1} parent=1 // pred_fallthru
      _
    // Predicated region
    $region6: #{motion_model_forward.1} parent=1 // pred_check
      _
    $region7: #{motion_model_forward.1} parent=1 // pred_check_branch
      %14 = sbr.rel (0) target = $region9
    $region8: #{motion_model_forward.1} parent=1 // pred_region
      _
    $region9: #{motion_model_forward.1} parent=1 // pred_fallthru
      _
    // Predicated region
    $region10: #{motion_model_forward.1} parent=1 // pred_check
      _
    $region11: #{motion_model_forward.1} parent=1 // pred_check_branch
      %16 = sbr.rel (0) target = $region13
    $region12: #{motion_model_forward.1} parent=1 // pred_region
      _
    $region13: #{motion_model_forward.1} parent=1 // pred_fallthru
      _
    %v17 = vld [vmem:[%s0] sm:$0xff]
    %v18 = vld [vmem:[%s1] sm:$0xff]
    %v19 = vld [vmem:[%s2] sm:$0xff]
    %v20 = vld [vmem:[%s2 + $0x8] sm:$0xff]
    %v21 = vld [vmem:[%s2 + $0x10] sm:$0xff]
    %v22 = vld [vmem:[%s2 + $0x18] sm:$0xff]
    %v23 = vld [vmem:[%s2 + $0x20] sm:$0xff]
    %v24 = vld [vmem:[%s2 + $0x28] sm:$0xff]
    %v25 = vld [vmem:[%s2 + $0x30] sm:$0x1]
    %v26 = vld [vmem:[%s2 + $0x31] sm:$0x1]
    %v27 = vlaneseq
    %v28 = vshrl.u32 %v27, 7
    %v29 = vsub.s32 0, %v28
    %v30 = vrot.slane %v25, %v29
    %vm31 = vcmask 130048
    %v33 = vsel %vm31, %v17, 0
    %35 = vmatprep.subr.mxu0 0.0
    %36 = vmatpush1.msra.mxu0 %v19
    %37 = vmatprep.subr.mxu0 0.0
    %38 = vmatpush1.msra.mxu0 %v20
    %39 = vmatprep.subr.mxu0 0.0
    %40 = vmatpush1.msra.mxu0 0.0
    %41 = vmatprep.subr.mxu0 0.0
    %42 = vmatpush1.msra.mxu0 0.0
    %43 = vmatprep.subr.mxu0 0.0
    %44 = vmatpush1.msra.mxu0 0.0
    %45 = vmatprep.subr.mxu0 0.0
    %46 = vmatpush1.msra.mxu0 0.0
    %47 = vmatprep.subr.mxu0 0.0
    %48 = vmatpush1.msra.mxu0 0.0
    %49 = vmatprep.subr.mxu0 0.0
    %50 = vmatpush1.msra.mxu0 0.0
    %51 = vmatprep.subr.mxu0 0.0
    %52 = vmatpush1.msra.mxu0 0.0
    %53 = vmatprep.subr.mxu0 0.0
    %54 = vmatpush1.msra.mxu0 0.0
    %55 = vmatprep.subr.mxu0 0.0
    %56 = vmatpush1.msra.mxu0 0.0
    %57 = vmatprep.subr.mxu0 0.0
    %58 = vmatpush1.msra.mxu0 0.0
    %59 = vmatprep.subr.mxu0 0.0
    %60 = vmatpush1.msra.mxu0 0.0
    %61 = vmatprep.subr.mxu0 0.0
    %62 = vmatpush1.msra.mxu0 0.0
    %63 = vmatprep.subr.mxu0 0.0
    %64 = vmatpush1.msra.mxu0 0.0
    %65 = vmatprep.subr.mxu0 0.0
    %66 = vmatpush1.msra.mxu0 0.0
    %67 = vmatprep.subr.mxu0 0.0
    %68 = vmatpush1.msra.mxu0 0.0
    %69 = vmatprep.subr.mxu0 0.0
    %70 = vmatpush1.msra.mxu0 0.0
    %71 = vmatprep.subr.mxu0 0.0
    %72 = vmatpush1.msra.mxu0 0.0
    %73 = vmatprep.subr.mxu0 0.0
    %74 = vmatpush1.msra.mxu0 0.0
    %75 = vmatprep.subr.mxu0 0.0
    %76 = vmatpush1.msra.mxu0 0.0
    %77 = vmatprep.subr.mxu0 0.0
    %78 = vmatpush1.msra.mxu0 0.0
    %79 = vmatprep.subr.mxu0 0.0
    %80 = vmatpush1.msra.mxu0 0.0
    %81 = vmatprep.subr.mxu0 0.0
    %82 = vmatpush1.msra.mxu0 0.0
    %83 = vmatprep.subr.mxu0 0.0
    %84 = vmatpush1.msra.mxu0 0.0
    %85 = vmatprep.subr.mxu0 0.0
    %86 = vmatpush1.msra.mxu0 0.0
    %87 = vmatprep.subr.mxu0 0.0
    %88 = vmatpush1.msra.mxu0 0.0
    %89 = vmatprep.subr.mxu0 0.0
    %90 = vmatpush1.msra.mxu0 0.0
    %91 = vmatprep.subr.mxu0 0.0
    %92 = vmatpush1.msra.mxu0 0.0
    %93 = vmatprep.subr.mxu0 0.0
    %94 = vmatpush1.msra.mxu0 0.0
    %95 = vmatprep.subr.mxu0 0.0
    %96 = vmatpush1.msra.mxu0 0.0
    %97 = vmatprep.subr.mxu0 0.0
    %98 = vmatpush1.msra.mxu0 0.0
    %99 = vmatprep.mubr.f32.mxu0 0.0
    %100 = vmatmul.mubr.f32.gmra.mrb[0].mxu0 %v33
    %v101 = vpop.f32.mrb[0].mxu0
    %v102 = vadd.f32 %v30, %v101
    %v103 = vpop.f32.mrb[0].mxu0
    %104 = vdwg.mxu0
    %vm105 = vcmask 261120
    %v107 = vsel %vm105, %v18, 0
    %109 = vmatprep.subr.mxu0 0.0
    %110 = vmatpush1.msra.mxu0 %v21
    %111 = vmatprep.subr.mxu0 0.0
    %112 = vmatpush1.msra.mxu0 %v22
    %113 = vmatprep.subr.mxu0 0.0
    %114 = vmatpush1.msra.mxu0 %v23
    %115 = vmatprep.subr.mxu0 0.0
    %116 = vmatpush1.msra.mxu0 %v24
    %117 = vmatprep.subr.mxu0 0.0
    %118 = vmatpush1.msra.mxu0 0.0
    %119 = vmatprep.subr.mxu0 0.0
    %120 = vmatpush1.msra.mxu0 0.0
    %121 = vmatprep.subr.mxu0 0.0
    %122 = vmatpush1.msra.mxu0 0.0
    %123 = vmatprep.subr.mxu0 0.0
    %124 = vmatpush1.msra.mxu0 0.0
    %125 = vmatprep.subr.mxu0 0.0
    %126 = vmatpush1.msra.mxu0 0.0
    %127 = vmatprep.subr.mxu0 0.0
    %128 = vmatpush1.msra.mxu0 0.0
    %129 = vmatprep.subr.mxu0 0.0
    %130 = vmatpush1.msra.mxu0 0.0
    %131 = vmatprep.subr.mxu0 0.0
    %132 = vmatpush1.msra.mxu0 0.0
    %133 = vmatprep.subr.mxu0 0.0
    %134 = vmatpush1.msra.mxu0 0.0
    %135 = vmatprep.subr.mxu0 0.0
    %136 = vmatpush1.msra.mxu0 0.0
    %137 = vmatprep.subr.mxu0 0.0
    %138 = vmatpush1.msra.mxu0 0.0
    %139 = vmatprep.subr.mxu0 0.0
    %140 = vmatpush1.msra.mxu0 0.0
    %141 = vmatprep.subr.mxu0 0.0
    %142 = vmatpush1.msra.mxu0 0.0
    %143 = vmatprep.subr.mxu0 0.0
    %144 = vmatpush1.msra.mxu0 0.0
    %145 = vmatprep.subr.mxu0 0.0
    %146 = vmatpush1.msra.mxu0 0.0
    %147 = vmatprep.subr.mxu0 0.0
    %148 = vmatpush1.msra.mxu0 0.0
    %149 = vmatprep.subr.mxu0 0.0
    %150 = vmatpush1.msra.mxu0 0.0
    %151 = vmatprep.subr.mxu0 0.0
    %152 = vmatpush1.msra.mxu0 0.0
    %153 = vmatprep.subr.mxu0 0.0
    %154 = vmatpush1.msra.mxu0 0.0
    %155 = vmatprep.subr.mxu0 0.0
    %156 = vmatpush1.msra.mxu0 0.0
    %157 = vmatprep.subr.mxu0 0.0
    %158 = vmatpush1.msra.mxu0 0.0
    %159 = vmatprep.subr.mxu0 0.0
    %160 = vmatpush1.msra.mxu0 0.0
    %161 = vmatprep.subr.mxu0 0.0
    %162 = vmatpush1.msra.mxu0 0.0
    %163 = vmatprep.subr.mxu0 0.0
    %164 = vmatpush1.msra.mxu0 0.0
    %165 = vmatprep.subr.mxu0 0.0
    %166 = vmatpush1.msra.mxu0 0.0
    %167 = vmatprep.subr.mxu0 0.0
    %168 = vmatpush1.msra.mxu0 0.0
    %169 = vmatprep.subr.mxu0 0.0
    %170 = vmatpush1.msra.mxu0 0.0
    %171 = vmatprep.subr.mxu0 0.0
    %172 = vmatpush1.msra.mxu0 0.0
    %173 = vmatprep.mubr.f32.mxu0 0.0
    %174 = vmatmul.mubr.f32.gmra.mrb[0].mxu0 %v107
    %v175 = vpop.f32.mrb[0].mxu0
    %v176 = vadd.f32 0.0, %v175
    %v177 = vpop.f32.mrb[0].mxu0
    %178 = vdwg.mxu0
    %v179 = vlaneseq
    %v180 = vshrl.u32 %v179, 7
    %v181 = vsub.s32 0, %v180
    %v182 = vrot.slane %v26, %v181
    %187 = vrot.lane.b32.xlu0 %v21, 64
    %v188 = vpop.permute.xlu0 %187
    %189 = vrot.lane.b32.xlu0 %v22, 64
    %v190 = vpop.permute.xlu0 %189
    %191 = vrot.lane.b32.xlu0 %v23, 64
    %v192 = vpop.permute.xlu0 %191
    %193 = vrot.lane.b32.xlu0 %v24, 64
    %v194 = vpop.permute.xlu0 %193
    %199 = vmatprep.subr.mxu0 0.0
    %200 = vmatpush1.msra.mxu0 %v188
    %201 = vmatprep.subr.mxu0 0.0
    %202 = vmatpush1.msra.mxu0 %v190
    %203 = vmatprep.subr.mxu0 0.0
    %204 = vmatpush1.msra.mxu0 %v192
    %205 = vmatprep.subr.mxu0 0.0
    %206 = vmatpush1.msra.mxu0 %v194
    %207 = vmatprep.subr.mxu0 0.0
    %208 = vmatpush1.msra.mxu0 0.0
    %209 = vmatprep.subr.mxu0 0.0
    %210 = vmatpush1.msra.mxu0 0.0
    %211 = vmatprep.subr.mxu0 0.0
    %212 = vmatpush1.msra.mxu0 0.0
    %213 = vmatprep.subr.mxu0 0.0
    %214 = vmatpush1.msra.mxu0 0.0
    %215 = vmatprep.subr.mxu0 0.0
    %216 = vmatpush1.msra.mxu0 0.0
    %217 = vmatprep.subr.mxu0 0.0
    %218 = vmatpush1.msra.mxu0 0.0
    %219 = vmatprep.subr.mxu0 0.0
    %220 = vmatpush1.msra.mxu0 0.0
    %221 = vmatprep.subr.mxu0 0.0
    %222 = vmatpush1.msra.mxu0 0.0
    %223 = vmatprep.subr.mxu0 0.0
    %224 = vmatpush1.msra.mxu0 0.0
    %225 = vmatprep.subr.mxu0 0.0
    %226 = vmatpush1.msra.mxu0 0.0
    %227 = vmatprep.subr.mxu0 0.0
    %228 = vmatpush1.msra.mxu0 0.0
    %229 = vmatprep.subr.mxu0 0.0
    %230 = vmatpush1.msra.mxu0 0.0
    %231 = vmatprep.subr.mxu0 0.0
    %232 = vmatpush1.msra.mxu0 0.0
    %233 = vmatprep.subr.mxu0 0.0
    %234 = vmatpush1.msra.mxu0 0.0
    %235 = vmatprep.subr.mxu0 0.0
    %236 = vmatpush1.msra.mxu0 0.0
    %237 = vmatprep.subr.mxu0 0.0
    %238 = vmatpush1.msra.mxu0 0.0
    %239 = vmatprep.subr.mxu0 0.0
    %240 = vmatpush1.msra.mxu0 0.0
    %241 = vmatprep.subr.mxu0 0.0
    %242 = vmatpush1.msra.mxu0 0.0
    %243 = vmatprep.subr.mxu0 0.0
    %244 = vmatpush1.msra.mxu0 0.0
    %245 = vmatprep.subr.mxu0 0.0
    %246 = vmatpush1.msra.mxu0 0.0
    %247 = vmatprep.subr.mxu0 0.0
    %248 = vmatpush1.msra.mxu0 0.0
    %249 = vmatprep.subr.mxu0 0.0
    %250 = vmatpush1.msra.mxu0 0.0
    %251 = vmatprep.subr.mxu0 0.0
    %252 = vmatpush1.msra.mxu0 0.0
    %253 = vmatprep.subr.mxu0 0.0
    %254 = vmatpush1.msra.mxu0 0.0
    %255 = vmatprep.subr.mxu0 0.0
    %256 = vmatpush1.msra.mxu0 0.0
    %257 = vmatprep.subr.mxu0 0.0
    %258 = vmatpush1.msra.mxu0 0.0
    %259 = vmatprep.subr.mxu0 0.0
    %260 = vmatpush1.msra.mxu0 0.0
    %261 = vmatprep.subr.mxu0 0.0
    %262 = vmatpush1.msra.mxu0 0.0
    %263 = vmatprep.mubr.f32.mxu0 0.0
    %264 = vmatmul.mubr.f32.gmra.mrb[0].mxu0 %v107
    %v265 = vpop.f32.mrb[0].mxu0
    %v266 = vadd.f32 %v182, %v265
    %v267 = vpop.f32.mrb[0].mxu0
    %268 = vdwg.mxu0
    %v269 = vadd.f32 %v102, %v176
    %v270 = vxor.u32 %v269, 2147483648
    %v271 = vmul.f32 %v270, 1.442695
    %v272 = vpow.pop %v271
    %v273 = vadd.f32 %v272, 1.0
    %v274 = vrcp.pop %v273
    %v275 = vmul.f32 1.0, %v274
    %v276 = vmul.f32 %v275, %v266
    %278 = vrot.lane.b32.xlu0 %v276, 64
    %v279 = vpop.permute.xlu0 %278
    %v281 = vadd.f32 %v102, %v279
    %v282 = vtanh.pop %v281
    %v283 = vsub.f32 1.0, %v275
    %285 = vrot.lane.b32.xlu0 %v282, 96
    %v286 = vpop.permute.xlu0 %285
    %v288 = vmul.f32 %v283, %v286
    %289 = vrot.lane.b32.xlu0 %v18, 32
    %v290 = vpop.permute.xlu0 %289
    %v292 = vmul.f32 %v275, %v290
    %v293 = vadd.f32 %v288, %v292
    %294 = vrot.lane.b32.xlu0 %v17, 112
    %v295 = vpop.permute.xlu0 %294
    %v296 = vsel %vm31, %v295, 0
    %298 = vmatprep.subr.mxu0 0.0
    %299 = vmatpush1.msra.mxu0 %v19
    %300 = vmatprep.subr.mxu0 0.0
    %301 = vmatpush1.msra.mxu0 %v20
    %302 = vmatprep.subr.mxu0 0.0
    %303 = vmatpush1.msra.mxu0 0.0
    %304 = vmatprep.subr.mxu0 0.0
    %305 = vmatpush1.msra.mxu0 0.0
    %306 = vmatprep.subr.mxu0 0.0
    %307 = vmatpush1.msra.mxu0 0.0
    %308 = vmatprep.subr.mxu0 0.0
    %309 = vmatpush1.msra.mxu0 0.0
    %310 = vmatprep.subr.mxu0 0.0
    %311 = vmatpush1.msra.mxu0 0.0
    %312 = vmatprep.subr.mxu0 0.0
    %313 = vmatpush1.msra.mxu0 0.0
    %314 = vmatprep.subr.mxu0 0.0
    %315 = vmatpush1.msra.mxu0 0.0
    %316 = vmatprep.subr.mxu0 0.0
    %317 = vmatpush1.msra.mxu0 0.0
    %318 = vmatprep.subr.mxu0 0.0
    %319 = vmatpush1.msra.mxu0 0.0
    %320 = vmatprep.subr.mxu0 0.0
    %321 = vmatpush1.msra.mxu0 0.0
    %322 = vmatprep.subr.mxu0 0.0
    %323 = vmatpush1.msra.mxu0 0.0
    %324 = vmatprep.subr.mxu0 0.0
    %325 = vmatpush1.msra.mxu0 0.0
    %326 = vmatprep.subr.mxu0 0.0
    %327 = vmatpush1.msra.mxu0 0.0
    %328 = vmatprep.subr.mxu0 0.0
    %329 = vmatpush1.msra.mxu0 0.0
    %330 = vmatprep.subr.mxu0 0.0
    %331 = vmatpush1.msra.mxu0 0.0
    %332 = vmatprep.subr.mxu0 0.0
    %333 = vmatpush1.msra.mxu0 0.0
    %334 = vmatprep.subr.mxu0 0.0
    %335 = vmatpush1.msra.mxu0 0.0
    %336 = vmatprep.subr.mxu0 0.0
    %337 = vmatpush1.msra.mxu0 0.0
    %338 = vmatprep.subr.mxu0 0.0
    %339 = vmatpush1.msra.mxu0 0.0
    %340 = vmatprep.subr.mxu0 0.0
    %341 = vmatpush1.msra.mxu0 0.0
    %342 = vmatprep.subr.mxu0 0.0
    %343 = vmatpush1.msra.mxu0 0.0
    %344 = vmatprep.subr.mxu0 0.0
    %345 = vmatpush1.msra.mxu0 0.0
    %346 = vmatprep.subr.mxu0 0.0
    %347 = vmatpush1.msra.mxu0 0.0
    %348 = vmatprep.subr.mxu0 0.0
    %349 = vmatpush1.msra.mxu0 0.0
    %350 = vmatprep.subr.mxu0 0.0
    %351 = vmatpush1.msra.mxu0 0.0
    %352 = vmatprep.subr.mxu0 0.0
    %353 = vmatpush1.msra.mxu0 0.0
    %354 = vmatprep.subr.mxu0 0.0
    %355 = vmatpush1.msra.mxu0 0.0
    %356 = vmatprep.subr.mxu0 0.0
    %357 = vmatpush1.msra.mxu0 0.0
    %358 = vmatprep.subr.mxu0 0.0
    %359 = vmatpush1.msra.mxu0 0.0
    %360 = vmatprep.subr.mxu0 0.0
    %361 = vmatpush1.msra.mxu0 0.0
    %362 = vmatprep.mubr.f32.mxu0 0.0
    %363 = vmatmul.mubr.f32.gmra.mrb[0].mxu0 %v296
    %v364 = vpop.f32.mrb[0].mxu0
    %v365 = vadd.f32 %v30, %v364
    %v366 = vpop.f32.mrb[0].mxu0
    %367 = vdwg.mxu0
    %369 = vrot.lane.b32.xlu0 %v293, 96
    %v370 = vpop.permute.xlu0 %369
    %v371 = vsel %vm105, %v370, 0
    %373 = vmatprep.subr.mxu0 0.0
    %374 = vmatpush1.msra.mxu0 %v21
    %375 = vmatprep.subr.mxu0 0.0
    %376 = vmatpush1.msra.mxu0 %v22
    %377 = vmatprep.subr.mxu0 0.0
    %378 = vmatpush1.msra.mxu0 %v23
    %379 = vmatprep.subr.mxu0 0.0
    %380 = vmatpush1.msra.mxu0 %v24
    %381 = vmatprep.subr.mxu0 0.0
    %382 = vmatpush1.msra.mxu0 0.0
    %383 = vmatprep.subr.mxu0 0.0
    %384 = vmatpush1.msra.mxu0 0.0
    %385 = vmatprep.subr.mxu0 0.0
    %386 = vmatpush1.msra.mxu0 0.0
    %387 = vmatprep.subr.mxu0 0.0
    %388 = vmatpush1.msra.mxu0 0.0
    %389 = vmatprep.subr.mxu0 0.0
    %390 = vmatpush1.msra.mxu0 0.0
    %391 = vmatprep.subr.mxu0 0.0
    %392 = vmatpush1.msra.mxu0 0.0
    %393 = vmatprep.subr.mxu0 0.0
    %394 = vmatpush1.msra.mxu0 0.0
    %395 = vmatprep.subr.mxu0 0.0
    %396 = vmatpush1.msra.mxu0 0.0
    %397 = vmatprep.subr.mxu0 0.0
    %398 = vmatpush1.msra.mxu0 0.0
    %399 = vmatprep.subr.mxu0 0.0
    %400 = vmatpush1.msra.mxu0 0.0
    %401 = vmatprep.subr.mxu0 0.0
    %402 = vmatpush1.msra.mxu0 0.0
    %403 = vmatprep.subr.mxu0 0.0
    %404 = vmatpush1.msra.mxu0 0.0
    %405 = vmatprep.subr.mxu0 0.0
    %406 = vmatpush1.msra.mxu0 0.0
    %407 = vmatprep.subr.mxu0 0.0
    %408 = vmatpush1.msra.mxu0 0.0
    %409 = vmatprep.subr.mxu0 0.0
    %410 = vmatpush1.msra.mxu0 0.0
    %411 = vmatprep.subr.mxu0 0.0
    %412 = vmatpush1.msra.mxu0 0.0
    %413 = vmatprep.subr.mxu0 0.0
    %414 = vmatpush1.msra.mxu0 0.0
    %415 = vmatprep.subr.mxu0 0.0
    %416 = vmatpush1.msra.mxu0 0.0
    %417 = vmatprep.subr.mxu0 0.0
    %418 = vmatpush1.msra.mxu0 0.0
    %419 = vmatprep.subr.mxu0 0.0
    %420 = vmatpush1.msra.mxu0 0.0
    %421 = vmatprep.subr.mxu0 0.0
    %422 = vmatpush1.msra.mxu0 0.0
    %423 = vmatprep.subr.mxu0 0.0
    %424 = vmatpush1.msra.mxu0 0.0
    %425 = vmatprep.subr.mxu0 0.0
    %426 = vmatpush1.msra.mxu0 0.0
    %427 = vmatprep.subr.mxu0 0.0
    %428 = vmatpush1.msra.mxu0 0.0
    %429 = vmatprep.subr.mxu0 0.0
    %430 = vmatpush1.msra.mxu0 0.0
    %431 = vmatprep.subr.mxu0 0.0
    %432 = vmatpush1.msra.mxu0 0.0
    %433 = vmatprep.subr.mxu0 0.0
    %434 = vmatpush1.msra.mxu0 0.0
    %435 = vmatprep.subr.mxu0 0.0
    %436 = vmatpush1.msra.mxu0 0.0
    %437 = vmatprep.mubr.f32.mxu0 0.0
    %438 = vmatmul.mubr.f32.gmra.mrb[0].mxu0 %v371
    %v439 = vpop.f32.mrb[0].mxu0
    %v440 = vadd.f32 0.0, %v439
    %v441 = vpop.f32.mrb[0].mxu0
    %442 = vdwg.mxu0
    %443 = vmatprep.subr.mxu0 0.0
    %444 = vmatpush1.msra.mxu0 %v188
    %445 = vmatprep.subr.mxu0 0.0
    %446 = vmatpush1.msra.mxu0 %v190
    %447 = vmatprep.subr.mxu0 0.0
    %448 = vmatpush1.msra.mxu0 %v192
    %449 = vmatprep.subr.mxu0 0.0
    %450 = vmatpush1.msra.mxu0 %v194
    %451 = vmatprep.subr.mxu0 0.0
    %452 = vmatpush1.msra.mxu0 0.0
    %453 = vmatprep.subr.mxu0 0.0
    %454 = vmatpush1.msra.mxu0 0.0
    %455 = vmatprep.subr.mxu0 0.0
    %456 = vmatpush1.msra.mxu0 0.0
    %457 = vmatprep.subr.mxu0 0.0
    %458 = vmatpush1.msra.mxu0 0.0
    %459 = vmatprep.subr.mxu0 0.0
    %460 = vmatpush1.msra.mxu0 0.0
    %461 = vmatprep.subr.mxu0 0.0
    %462 = vmatpush1.msra.mxu0 0.0
    %463 = vmatprep.subr.mxu0 0.0
    %464 = vmatpush1.msra.mxu0 0.0
    %465 = vmatprep.subr.mxu0 0.0
    %466 = vmatpush1.msra.mxu0 0.0
    %467 = vmatprep.subr.mxu0 0.0
    %468 = vmatpush1.msra.mxu0 0.0
    %469 = vmatprep.subr.mxu0 0.0
    %470 = vmatpush1.msra.mxu0 0.0
    %471 = vmatprep.subr.mxu0 0.0
    %472 = vmatpush1.msra.mxu0 0.0
    %473 = vmatprep.subr.mxu0 0.0
    %474 = vmatpush1.msra.mxu0 0.0
    %475 = vmatprep.subr.mxu0 0.0
    %476 = vmatpush1.msra.mxu0 0.0
    %477 = vmatprep.subr.mxu0 0.0
    %478 = vmatpush1.msra.mxu0 0.0
    %479 = vmatprep.subr.mxu0 0.0
    %480 = vmatpush1.msra.mxu0 0.0
    %481 = vmatprep.subr.mxu0 0.0
    %482 = vmatpush1.msra.mxu0 0.0
    %483 = vmatprep.subr.mxu0 0.0
    %484 = vmatpush1.msra.mxu0 0.0
    %485 = vmatprep.subr.mxu0 0.0
    %486 = vmatpush1.msra.mxu0 0.0
    %487 = vmatprep.subr.mxu0 0.0
    %488 = vmatpush1.msra.mxu0 0.0
    %489 = vmatprep.subr.mxu0 0.0
    %490 = vmatpush1.msra.mxu0 0.0
    %491 = vmatprep.subr.mxu0 0.0
    %492 = vmatpush1.msra.mxu0 0.0
    %493 = vmatprep.subr.mxu0 0.0
    %494 = vmatpush1.msra.mxu0 0.0
    %495 = vmatprep.subr.mxu0 0.0
    %496 = vmatpush1.msra.mxu0 0.0
    %497 = vmatprep.subr.mxu0 0.0
    %498 = vmatpush1.msra.mxu0 0.0
    %499 = vmatprep.subr.mxu0 0.0
    %500 = vmatpush1.msra.mxu0 0.0
    %501 = vmatprep.subr.mxu0 0.0
    %502 = vmatpush1.msra.mxu0 0.0
    %503 = vmatprep.subr.mxu0 0.0
    %504 = vmatpush1.msra.mxu0 0.0
    %505 = vmatprep.subr.mxu0 0.0
    %506 = vmatpush1.msra.mxu0 0.0
    %507 = vmatprep.mubr.f32.mxu0 0.0
    %508 = vmatmul.mubr.f32.gmra.mrb[0].mxu0 %v371
    %v509 = vpop.f32.mrb[0].mxu0
    %v510 = vadd.f32 %v182, %v509
    %v511 = vpop.f32.mrb[0].mxu0
    %512 = vdwg.mxu0
    %v513 = vadd.f32 %v365, %v440
    %v514 = vxor.u32 %v513, 2147483648
    %v515 = vmul.f32 %v514, 1.442695
    %v516 = vpow.pop %v515
    %v517 = vadd.f32 %v516, 1.0
    %v518 = vrcp.pop %v517
    %v519 = vmul.f32 1.0, %v518
    %v520 = vmul.f32 %v519, %v510
    %522 = vrot.lane.b32.xlu0 %v520, 64
    %v523 = vpop.permute.xlu0 %522
    %v525 = vadd.f32 %v365, %v523
    %v526 = vtanh.pop %v525
    %v527 = vsub.f32 1.0, %v519
    %529 = vrot.lane.b32.xlu0 %v526, 96
    %v530 = vpop.permute.xlu0 %529
    %v532 = vmul.f32 %v527, %v530
    %v533 = vmul.f32 %v519, %v293
    %v534 = vadd.f32 %v532, %v533
    %535 = vrot.lane.b32.xlu0 %v17, 96
    %v536 = vpop.permute.xlu0 %535
    %v537 = vsel %vm31, %v536, 0
    %539 = vmatprep.subr.mxu0 0.0
    %540 = vmatpush1.msra.mxu0 %v19
    %541 = vmatprep.subr.mxu0 0.0
    %542 = vmatpush1.msra.mxu0 %v20
    %543 = vmatprep.subr.mxu0 0.0
    %544 = vmatpush1.msra.mxu0 0.0
    %545 = vmatprep.subr.mxu0 0.0
    %546 = vmatpush1.msra.mxu0 0.0
    %547 = vmatprep.subr.mxu0 0.0
    %548 = vmatpush1.msra.mxu0 0.0
    %549 = vmatprep.subr.mxu0 0.0
    %550 = vmatpush1.msra.mxu0 0.0
    %551 = vmatprep.subr.mxu0 0.0
    %552 = vmatpush1.msra.mxu0 0.0
    %553 = vmatprep.subr.mxu0 0.0
    %554 = vmatpush1.msra.mxu0 0.0
    %555 = vmatprep.subr.mxu0 0.0
    %556 = vmatpush1.msra.mxu0 0.0
    %557 = vmatprep.subr.mxu0 0.0
    %558 = vmatpush1.msra.mxu0 0.0
    %559 = vmatprep.subr.mxu0 0.0
    %560 = vmatpush1.msra.mxu0 0.0
    %561 = vmatprep.subr.mxu0 0.0
    %562 = vmatpush1.msra.mxu0 0.0
    %563 = vmatprep.subr.mxu0 0.0
    %564 = vmatpush1.msra.mxu0 0.0
    %565 = vmatprep.subr.mxu0 0.0
    %566 = vmatpush1.msra.mxu0 0.0
    %567 = vmatprep.subr.mxu0 0.0
    %568 = vmatpush1.msra.mxu0 0.0
    %569 = vmatprep.subr.mxu0 0.0
    %570 = vmatpush1.msra.mxu0 0.0
    %571 = vmatprep.subr.mxu0 0.0
    %572 = vmatpush1.msra.mxu0 0.0
    %573 = vmatprep.subr.mxu0 0.0
    %574 = vmatpush1.msra.mxu0 0.0
    %575 = vmatprep.subr.mxu0 0.0
    %576 = vmatpush1.msra.mxu0 0.0
    %577 = vmatprep.subr.mxu0 0.0
    %578 = vmatpush1.msra.mxu0 0.0
    %579 = vmatprep.subr.mxu0 0.0
    %580 = vmatpush1.msra.mxu0 0.0
    %581 = vmatprep.subr.mxu0 0.0
    %582 = vmatpush1.msra.mxu0 0.0
    %583 = vmatprep.subr.mxu0 0.0
    %584 = vmatpush1.msra.mxu0 0.0
    %585 = vmatprep.subr.mxu0 0.0
    %586 = vmatpush1.msra.mxu0 0.0
    %587 = vmatprep.subr.mxu0 0.0
    %588 = vmatpush1.msra.mxu0 0.0
    %589 = vmatprep.subr.mxu0 0.0
    %590 = vmatpush1.msra.mxu0 0.0
    %591 = vmatprep.subr.mxu0 0.0
    %592 = vmatpush1.msra.mxu0 0.0
    %593 = vmatprep.subr.mxu0 0.0
    %594 = vmatpush1.msra.mxu0 0.0
    %595 = vmatprep.subr.mxu0 0.0
    %596 = vmatpush1.msra.mxu0 0.0
    %597 = vmatprep.subr.mxu0 0.0
    %598 = vmatpush1.msra.mxu0 0.0
    %599 = vmatprep.subr.mxu0 0.0
    %600 = vmatpush1.msra.mxu0 0.0
    %601 = vmatprep.subr.mxu0 0.0
    %602 = vmatpush1.msra.mxu0 0.0
    %603 = vmatprep.mubr.f32.mxu0 0.0
    %604 = vmatmul.mubr.f32.gmra.mrb[0].mxu0 %v537
    %v605 = vpop.f32.mrb[0].mxu0
    %v606 = vadd.f32 %v30, %v605
    %v607 = vpop.f32.mrb[0].mxu0
    %608 = vdwg.mxu0
    %610 = vrot.lane.b32.xlu0 %v534, 96
    %v611 = vpop.permute.xlu0 %610
    %v612 = vsel %vm105, %v611, 0
    %614 = vmatprep.subr.mxu0 0.0
    %615 = vmatpush1.msra.mxu0 %v21
    %616 = vmatprep.subr.mxu0 0.0
    %617 = vmatpush1.msra.mxu0 %v22
    %618 = vmatprep.subr.mxu0 0.0
    %619 = vmatpush1.msra.mxu0 %v23
    %620 = vmatprep.subr.mxu0 0.0
    %621 = vmatpush1.msra.mxu0 %v24
    %622 = vmatprep.subr.mxu0 0.0
    %623 = vmatpush1.msra.mxu0 0.0
    %624 = vmatprep.subr.mxu0 0.0
    %625 = vmatpush1.msra.mxu0 0.0
    %626 = vmatprep.subr.mxu0 0.0
    %627 = vmatpush1.msra.mxu0 0.0
    %628 = vmatprep.subr.mxu0 0.0
    %629 = vmatpush1.msra.mxu0 0.0
    %630 = vmatprep.subr.mxu0 0.0
    %631 = vmatpush1.msra.mxu0 0.0
    %632 = vmatprep.subr.mxu0 0.0
    %633 = vmatpush1.msra.mxu0 0.0
    %634 = vmatprep.subr.mxu0 0.0
    %635 = vmatpush1.msra.mxu0 0.0
    %636 = vmatprep.subr.mxu0 0.0
    %637 = vmatpush1.msra.mxu0 0.0
    %638 = vmatprep.subr.mxu0 0.0
    %639 = vmatpush1.msra.mxu0 0.0
    %640 = vmatprep.subr.mxu0 0.0
    %641 = vmatpush1.msra.mxu0 0.0
    %642 = vmatprep.subr.mxu0 0.0
    %643 = vmatpush1.msra.mxu0 0.0
    %644 = vmatprep.subr.mxu0 0.0
    %645 = vmatpush1.msra.mxu0 0.0
    %646 = vmatprep.subr.mxu0 0.0
    %647 = vmatpush1.msra.mxu0 0.0
    %648 = vmatprep.subr.mxu0 0.0
    %649 = vmatpush1.msra.mxu0 0.0
    %650 = vmatprep.subr.mxu0 0.0
    %651 = vmatpush1.msra.mxu0 0.0
    %652 = vmatprep.subr.mxu0 0.0
    %653 = vmatpush1.msra.mxu0 0.0
    %654 = vmatprep.subr.mxu0 0.0
    %655 = vmatpush1.msra.mxu0 0.0
    %656 = vmatprep.subr.mxu0 0.0
    %657 = vmatpush1.msra.mxu0 0.0
    %658 = vmatprep.subr.mxu0 0.0
    %659 = vmatpush1.msra.mxu0 0.0
    %660 = vmatprep.subr.mxu0 0.0
    %661 = vmatpush1.msra.mxu0 0.0
    %662 = vmatprep.subr.mxu0 0.0
    %663 = vmatpush1.msra.mxu0 0.0
    %664 = vmatprep.subr.mxu0 0.0
    %665 = vmatpush1.msra.mxu0 0.0
    %666 = vmatprep.subr.mxu0 0.0
    %667 = vmatpush1.msra.mxu0 0.0
    %668 = vmatprep.subr.mxu0 0.0
    %669 = vmatpush1.msra.mxu0 0.0
    %670 = vmatprep.subr.mxu0 0.0
    %671 = vmatpush1.msra.mxu0 0.0
    %672 = vmatprep.subr.mxu0 0.0
    %673 = vmatpush1.msra.mxu0 0.0
    %674 = vmatprep.subr.mxu0 0.0
    %675 = vmatpush1.msra.mxu0 0.0
    %676 = vmatprep.subr.mxu0 0.0
    %677 = vmatpush1.msra.mxu0 0.0
    %678 = vmatprep.mubr.f32.mxu0 0.0
    %679 = vmatmul.mubr.f32.gmra.mrb[0].mxu0 %v612
    %v680 = vpop.f32.mrb[0].mxu0
    %v681 = vadd.f32 0.0, %v680
    %v682 = vpop.f32.mrb[0].mxu0
    %683 = vdwg.mxu0
    %684 = vmatprep.subr.mxu0 0.0
    %685 = vmatpush1.msra.mxu0 %v188
    %686 = vmatprep.subr.mxu0 0.0
    %687 = vmatpush1.msra.mxu0 %v190
    %688 = vmatprep.subr.mxu0 0.0
    %689 = vmatpush1.msra.mxu0 %v192
    %690 = vmatprep.subr.mxu0 0.0
    %691 = vmatpush1.msra.mxu0 %v194
    %692 = vmatprep.subr.mxu0 0.0
    %693 = vmatpush1.msra.mxu0 0.0
    %694 = vmatprep.subr.mxu0 0.0
    %695 = vmatpush1.msra.mxu0 0.0
    %696 = vmatprep.subr.mxu0 0.0
    %697 = vmatpush1.msra.mxu0 0.0
    %698 = vmatprep.subr.mxu0 0.0
    %699 = vmatpush1.msra.mxu0 0.0
    %700 = vmatprep.subr.mxu0 0.0
    %701 = vmatpush1.msra.mxu0 0.0
    %702 = vmatprep.subr.mxu0 0.0
    %703 = vmatpush1.msra.mxu0 0.0
    %704 = vmatprep.subr.mxu0 0.0
    %705 = vmatpush1.msra.mxu0 0.0
    %706 = vmatprep.subr.mxu0 0.0
    %707 = vmatpush1.msra.mxu0 0.0
    %708 = vmatprep.subr.mxu0 0.0
    %709 = vmatpush1.msra.mxu0 0.0
    %710 = vmatprep.subr.mxu0 0.0
    %711 = vmatpush1.msra.mxu0 0.0
    %712 = vmatprep.subr.mxu0 0.0
    %713 = vmatpush1.msra.mxu0 0.0
    %714 = vmatprep.subr.mxu0 0.0
    %715 = vmatpush1.msra.mxu0 0.0
    %716 = vmatprep.subr.mxu0 0.0
    %717 = vmatpush1.msra.mxu0 0.0
    %718 = vmatprep.subr.mxu0 0.0
    %719 = vmatpush1.msra.mxu0 0.0
    %720 = vmatprep.subr.mxu0 0.0
    %721 = vmatpush1.msra.mxu0 0.0
    %722 = vmatprep.subr.mxu0 0.0
    %723 = vmatpush1.msra.mxu0 0.0
    %724 = vmatprep.subr.mxu0 0.0
    %725 = vmatpush1.msra.mxu0 0.0
    %726 = vmatprep.subr.mxu0 0.0
    %727 = vmatpush1.msra.mxu0 0.0
    %728 = vmatprep.subr.mxu0 0.0
    %729 = vmatpush1.msra.mxu0 0.0
    %730 = vmatprep.subr.mxu0 0.0
    %731 = vmatpush1.msra.mxu0 0.0
    %732 = vmatprep.subr.mxu0 0.0
    %733 = vmatpush1.msra.mxu0 0.0
    %734 = vmatprep.subr.mxu0 0.0
    %735 = vmatpush1.msra.mxu0 0.0
    %736 = vmatprep.subr.mxu0 0.0
    %737 = vmatpush1.msra.mxu0 0.0
    %738 = vmatprep.subr.mxu0 0.0
    %739 = vmatpush1.msra.mxu0 0.0
    %740 = vmatprep.subr.mxu0 0.0
    %741 = vmatpush1.msra.mxu0 0.0
    %742 = vmatprep.subr.mxu0 0.0
    %743 = vmatpush1.msra.mxu0 0.0
    %744 = vmatprep.subr.mxu0 0.0
    %745 = vmatpush1.msra.mxu0 0.0
    %746 = vmatprep.subr.mxu0 0.0
    %747 = vmatpush1.msra.mxu0 0.0
    %748 = vmatprep.mubr.f32.mxu0 0.0
    %749 = vmatmul.mubr.f32.gmra.mrb[0].mxu0 %v612
    %v750 = vpop.f32.mrb[0].mxu0
    %v751 = vadd.f32 %v182, %v750
    %v752 = vpop.f32.mrb[0].mxu0
    %753 = vdwg.mxu0
    %v754 = vadd.f32 %v606, %v681
    %v755 = vxor.u32 %v754, 2147483648
    %v756 = vmul.f32 %v755, 1.442695
    %v757 = vpow.pop %v756
    %v758 = vadd.f32 %v757, 1.0
    %v759 = vrcp.pop %v758
    %v760 = vmul.f32 1.0, %v759
    %v761 = vmul.f32 %v760, %v751
    %763 = vrot.lane.b32.xlu0 %v761, 64
    %v764 = vpop.permute.xlu0 %763
    %v766 = vadd.f32 %v606, %v764
    %v767 = vtanh.pop %v766
    %v768 = vsub.f32 1.0, %v760
    %770 = vrot.lane.b32.xlu0 %v767, 96
    %v771 = vpop.permute.xlu0 %770
    %v773 = vmul.f32 %v768, %v771
    %v774 = vmul.f32 %v760, %v534
    %v775 = vadd.f32 %v773, %v774
    %776 = vrot.lane.b32.xlu0 %v17, 80
    %v777 = vpop.permute.xlu0 %776
    %v778 = vsel %vm31, %v777, 0
    %780 = vmatprep.subr.mxu0 0.0
    %781 = vmatpush1.msra.mxu0 %v19
    %782 = vmatprep.subr.mxu0 0.0
    %783 = vmatpush1.msra.mxu0 %v20
    %784 = vmatprep.subr.mxu0 0.0
    %785 = vmatpush1.msra.mxu0 0.0
    %786 = vmatprep.subr.mxu0 0.0
    %787 = vmatpush1.msra.mxu0 0.0
    %788 = vmatprep.subr.mxu0 0.0
    %789 = vmatpush1.msra.mxu0 0.0
    %790 = vmatprep.subr.mxu0 0.0
    %791 = vmatpush1.msra.mxu0 0.0
    %792 = vmatprep.subr.mxu0 0.0
    %793 = vmatpush1.msra.mxu0 0.0
    %794 = vmatprep.subr.mxu0 0.0
    %795 = vmatpush1.msra.mxu0 0.0
    %796 = vmatprep.subr.mxu0 0.0
    %797 = vmatpush1.msra.mxu0 0.0
    %798 = vmatprep.subr.mxu0 0.0
    %799 = vmatpush1.msra.mxu0 0.0
    %800 = vmatprep.subr.mxu0 0.0
    %801 = vmatpush1.msra.mxu0 0.0
    %802 = vmatprep.subr.mxu0 0.0
    %803 = vmatpush1.msra.mxu0 0.0
    %804 = vmatprep.subr.mxu0 0.0
    %805 = vmatpush1.msra.mxu0 0.0
    %806 = vmatprep.subr.mxu0 0.0
    %807 = vmatpush1.msra.mxu0 0.0
    %808 = vmatprep.subr.mxu0 0.0
    %809 = vmatpush1.msra.mxu0 0.0
    %810 = vmatprep.subr.mxu0 0.0
    %811 = vmatpush1.msra.mxu0 0.0
    %812 = vmatprep.subr.mxu0 0.0
    %813 = vmatpush1.msra.mxu0 0.0
    %814 = vmatprep.subr.mxu0 0.0
    %815 = vmatpush1.msra.mxu0 0.0
    %816 = vmatprep.subr.mxu0 0.0
    %817 = vmatpush1.msra.mxu0 0.0
    %818 = vmatprep.subr.mxu0 0.0
    %819 = vmatpush1.msra.mxu0 0.0
    %820 = vmatprep.subr.mxu0 0.0
    %821 = vmatpush1.msra.mxu0 0.0
    %822 = vmatprep.subr.mxu0 0.0
    %823 = vmatpush1.msra.mxu0 0.0
    %824 = vmatprep.subr.mxu0 0.0
    %825 = vmatpush1.msra.mxu0 0.0
    %826 = vmatprep.subr.mxu0 0.0
    %827 = vmatpush1.msra.mxu0 0.0
    %828 = vmatprep.subr.mxu0 0.0
    %829 = vmatpush1.msra.mxu0 0.0
    %830 = vmatprep.subr.mxu0 0.0
    %831 = vmatpush1.msra.mxu0 0.0
    %832 = vmatprep.subr.mxu0 0.0
    %833 = vmatpush1.msra.mxu0 0.0
    %834 = vmatprep.subr.mxu0 0.0
    %835 = vmatpush1.msra.mxu0 0.0
    %836 = vmatprep.subr.mxu0 0.0
    %837 = vmatpush1.msra.mxu0 0.0
    %838 = vmatprep.subr.mxu0 0.0
    %839 = vmatpush1.msra.mxu0 0.0
    %840 = vmatprep.subr.mxu0 0.0
    %841 = vmatpush1.msra.mxu0 0.0
    %842 = vmatprep.subr.mxu0 0.0
    %843 = vmatpush1.msra.mxu0 0.0
    %844 = vmatprep.mubr.f32.mxu0 0.0
    %845 = vmatmul.mubr.f32.gmra.mrb[0].mxu0 %v778
    %v846 = vpop.f32.mrb[0].mxu0
    %v847 = vadd.f32 %v30, %v846
    %v848 = vpop.f32.mrb[0].mxu0
    %849 = vdwg.mxu0
    %851 = vrot.lane.b32.xlu0 %v775, 96
    %v852 = vpop.permute.xlu0 %851
    %v853 = vsel %vm105, %v852, 0
    %855 = vmatprep.subr.mxu0 0.0
    %856 = vmatpush1.msra.mxu0 %v21
    %857 = vmatprep.subr.mxu0 0.0
    %858 = vmatpush1.msra.mxu0 %v22
    %859 = vmatprep.subr.mxu0 0.0
    %860 = vmatpush1.msra.mxu0 %v23
    %861 = vmatprep.subr.mxu0 0.0
    %862 = vmatpush1.msra.mxu0 %v24
    %863 = vmatprep.subr.mxu0 0.0
    %864 = vmatpush1.msra.mxu0 0.0
    %865 = vmatprep.subr.mxu0 0.0
    %866 = vmatpush1.msra.mxu0 0.0
    %867 = vmatprep.subr.mxu0 0.0
    %868 = vmatpush1.msra.mxu0 0.0
    %869 = vmatprep.subr.mxu0 0.0
    %870 = vmatpush1.msra.mxu0 0.0
    %871 = vmatprep.subr.mxu0 0.0
    %872 = vmatpush1.msra.mxu0 0.0
    %873 = vmatprep.subr.mxu0 0.0
    %874 = vmatpush1.msra.mxu0 0.0
    %875 = vmatprep.subr.mxu0 0.0
    %876 = vmatpush1.msra.mxu0 0.0
    %877 = vmatprep.subr.mxu0 0.0
    %878 = vmatpush1.msra.mxu0 0.0
    %879 = vmatprep.subr.mxu0 0.0
    %880 = vmatpush1.msra.mxu0 0.0
    %881 = vmatprep.subr.mxu0 0.0
    %882 = vmatpush1.msra.mxu0 0.0
    %883 = vmatprep.subr.mxu0 0.0
    %884 = vmatpush1.msra.mxu0 0.0
    %885 = vmatprep.subr.mxu0 0.0
    %886 = vmatpush1.msra.mxu0 0.0
    %887 = vmatprep.subr.mxu0 0.0
    %888 = vmatpush1.msra.mxu0 0.0
    %889 = vmatprep.subr.mxu0 0.0
    %890 = vmatpush1.msra.mxu0 0.0
    %891 = vmatprep.subr.mxu0 0.0
    %892 = vmatpush1.msra.mxu0 0.0
    %893 = vmatprep.subr.mxu0 0.0
    %894 = vmatpush1.msra.mxu0 0.0
    %895 = vmatprep.subr.mxu0 0.0
    %896 = vmatpush1.msra.mxu0 0.0
    %897 = vmatprep.subr.mxu0 0.0
    %898 = vmatpush1.msra.mxu0 0.0
    %899 = vmatprep.subr.mxu0 0.0
    %900 = vmatpush1.msra.mxu0 0.0
    %901 = vmatprep.subr.mxu0 0.0
    %902 = vmatpush1.msra.mxu0 0.0
    %903 = vmatprep.subr.mxu0 0.0
    %904 = vmatpush1.msra.mxu0 0.0
    %905 = vmatprep.subr.mxu0 0.0
    %906 = vmatpush1.msra.mxu0 0.0
    %907 = vmatprep.subr.mxu0 0.0
    %908 = vmatpush1.msra.mxu0 0.0
    %909 = vmatprep.subr.mxu0 0.0
    %910 = vmatpush1.msra.mxu0 0.0
    %911 = vmatprep.subr.mxu0 0.0
    %912 = vmatpush1.msra.mxu0 0.0
    %913 = vmatprep.subr.mxu0 0.0
    %914 = vmatpush1.msra.mxu0 0.0
    %915 = vmatprep.subr.mxu0 0.0
    %916 = vmatpush1.msra.mxu0 0.0
    %917 = vmatprep.subr.mxu0 0.0
    %918 = vmatpush1.msra.mxu0 0.0
    %919 = vmatprep.mubr.f32.mxu0 0.0
    %920 = vmatmul.mubr.f32.gmra.mrb[0].mxu0 %v853
    %v921 = vpop.f32.mrb[0].mxu0
    %v922 = vadd.f32 0.0, %v921
    %v923 = vpop.f32.mrb[0].mxu0
    %924 = vdwg.mxu0
    %925 = vmatprep.subr.mxu0 0.0
    %926 = vmatpush1.msra.mxu0 %v188
    %927 = vmatprep.subr.mxu0 0.0
    %928 = vmatpush1.msra.mxu0 %v190
    %929 = vmatprep.subr.mxu0 0.0
    %930 = vmatpush1.msra.mxu0 %v192
    %931 = vmatprep.subr.mxu0 0.0
    %932 = vmatpush1.msra.mxu0 %v194
    %933 = vmatprep.subr.mxu0 0.0
    %934 = vmatpush1.msra.mxu0 0.0
    %935 = vmatprep.subr.mxu0 0.0
    %936 = vmatpush1.msra.mxu0 0.0
    %937 = vmatprep.subr.mxu0 0.0
    %938 = vmatpush1.msra.mxu0 0.0
    %939 = vmatprep.subr.mxu0 0.0
    %940 = vmatpush1.msra.mxu0 0.0
    %941 = vmatprep.subr.mxu0 0.0
    %942 = vmatpush1.msra.mxu0 0.0
    %943 = vmatprep.subr.mxu0 0.0
    %944 = vmatpush1.msra.mxu0 0.0
    %945 = vmatprep.subr.mxu0 0.0
    %946 = vmatpush1.msra.mxu0 0.0
    %947 = vmatprep.subr.mxu0 0.0
    %948 = vmatpush1.msra.mxu0 0.0
    %949 = vmatprep.subr.mxu0 0.0
    %950 = vmatpush1.msra.mxu0 0.0
    %951 = vmatprep.subr.mxu0 0.0
    %952 = vmatpush1.msra.mxu0 0.0
    %953 = vmatprep.subr.mxu0 0.0
    %954 = vmatpush1.msra.mxu0 0.0
    %955 = vmatprep.subr.mxu0 0.0
    %956 = vmatpush1.msra.mxu0 0.0
    %957 = vmatprep.subr.mxu0 0.0
    %958 = vmatpush1.msra.mxu0 0.0
    %959 = vmatprep.subr.mxu0 0.0
    %960 = vmatpush1.msra.mxu0 0.0
    %961 = vmatprep.subr.mxu0 0.0
    %962 = vmatpush1.msra.mxu0 0.0
    %963 = vmatprep.subr.mxu0 0.0
    %964 = vmatpush1.msra.mxu0 0.0
    %965 = vmatprep.subr.mxu0 0.0
    %966 = vmatpush1.msra.mxu0 0.0
    %967 = vmatprep.subr.mxu0 0.0
    %968 = vmatpush1.msra.mxu0 0.0
    %969 = vmatprep.subr.mxu0 0.0
    %970 = vmatpush1.msra.mxu0 0.0
    %971 = vmatprep.subr.mxu0 0.0
    %972 = vmatpush1.msra.mxu0 0.0
    %973 = vmatprep.subr.mxu0 0.0
    %974 = vmatpush1.msra.mxu0 0.0
    %975 = vmatprep.subr.mxu0 0.0
    %976 = vmatpush1.msra.mxu0 0.0
    %977 = vmatprep.subr.mxu0 0.0
    %978 = vmatpush1.msra.mxu0 0.0
    %979 = vmatprep.subr.mxu0 0.0
    %980 = vmatpush1.msra.mxu0 0.0
    %981 = vmatprep.subr.mxu0 0.0
    %982 = vmatpush1.msra.mxu0 0.0
    %983 = vmatprep.subr.mxu0 0.0
    %984 = vmatpush1.msra.mxu0 0.0
    %985 = vmatprep.subr.mxu0 0.0
    %986 = vmatpush1.msra.mxu0 0.0
    %987 = vmatprep.subr.mxu0 0.0
    %988 = vmatpush1.msra.mxu0 0.0
    %989 = vmatprep.mubr.f32.mxu0 0.0
    %990 = vmatmul.mubr.f32.gmra.mrb[0].mxu0 %v853
    %v991 = vpop.f32.mrb[0].mxu0
    %v992 = vadd.f32 %v182, %v991
    %v993 = vpop.f32.mrb[0].mxu0
    %994 = vdwg.mxu0
    %v995 = vadd.f32 %v847, %v922
    %v996 = vxor.u32 %v995, 2147483648
    %v997 = vmul.f32 %v996, 1.442695
    %v998 = vpow.pop %v997
    %v999 = vadd.f32 %v998, 1.0
    %v1000 = vrcp.pop %v999
    %v1001 = vmul.f32 1.0, %v1000
    %v1002 = vmul.f32 %v1001, %v992
    %1004 = vrot.lane.b32.xlu0 %v1002, 64
    %v1005 = vpop.permute.xlu0 %1004
    %v1007 = vadd.f32 %v847, %v1005
    %v1008 = vtanh.pop %v1007
    %v1009 = vsub.f32 1.0, %v1001
    %1011 = vrot.lane.b32.xlu0 %v1008, 96
    %v1012 = vpop.permute.xlu0 %1011
    %v1014 = vmul.f32 %v1009, %v1012
    %v1015 = vmul.f32 %v1001, %v775
    %v1016 = vadd.f32 %v1014, %v1015
    %1017 = vrot.lane.b32.xlu0 %v17, 64
    %v1018 = vpop.permute.xlu0 %1017
    %v1019 = vsel %vm31, %v1018, 0
    %1021 = vmatprep.subr.mxu0 0.0
    %1022 = vmatpush1.msra.mxu0 %v19
    %1023 = vmatprep.subr.mxu0 0.0
    %1024 = vmatpush1.msra.mxu0 %v20
    %1025 = vmatprep.subr.mxu0 0.0
    %1026 = vmatpush1.msra.mxu0 0.0
    %1027 = vmatprep.subr.mxu0 0.0
    %1028 = vmatpush1.msra.mxu0 0.0
    %1029 = vmatprep.subr.mxu0 0.0
    %1030 = vmatpush1.msra.mxu0 0.0
    %1031 = vmatprep.subr.mxu0 0.0
    %1032 = vmatpush1.msra.mxu0 0.0
    %1033 = vmatprep.subr.mxu0 0.0
    %1034 = vmatpush1.msra.mxu0 0.0
    %1035 = vmatprep.subr.mxu0 0.0
    %1036 = vmatpush1.msra.mxu0 0.0
    %1037 = vmatprep.subr.mxu0 0.0
    %1038 = vmatpush1.msra.mxu0 0.0
    %1039 = vmatprep.subr.mxu0 0.0
    %1040 = vmatpush1.msra.mxu0 0.0
    %1041 = vmatprep.subr.mxu0 0.0
    %1042 = vmatpush1.msra.mxu0 0.0
    %1043 = vmatprep.subr.mxu0 0.0
    %1044 = vmatpush1.msra.mxu0 0.0
    %1045 = vmatprep.subr.mxu0 0.0
    %1046 = vmatpush1.msra.mxu0 0.0
    %1047 = vmatprep.subr.mxu0 0.0
    %1048 = vmatpush1.msra.mxu0 0.0
    %1049 = vmatprep.subr.mxu0 0.0
    %1050 = vmatpush1.msra.mxu0 0.0
    %1051 = vmatprep.subr.mxu0 0.0
    %1052 = vmatpush1.msra.mxu0 0.0
    %1053 = vmatprep.subr.mxu0 0.0
    %1054 = vmatpush1.msra.mxu0 0.0
    %1055 = vmatprep.subr.mxu0 0.0
    %1056 = vmatpush1.msra.mxu0 0.0
    %1057 = vmatprep.subr.mxu0 0.0
    %1058 = vmatpush1.msra.mxu0 0.0
    %1059 = vmatprep.subr.mxu0 0.0
    %1060 = vmatpush1.msra.mxu0 0.0
    %1061 = vmatprep.subr.mxu0 0.0
    %1062 = vmatpush1.msra.mxu0 0.0
    %1063 = vmatprep.subr.mxu0 0.0
    %1064 = vmatpush1.msra.mxu0 0.0
    %1065 = vmatprep.subr.mxu0 0.0
    %1066 = vmatpush1.msra.mxu0 0.0
    %1067 = vmatprep.subr.mxu0 0.0
    %1068 = vmatpush1.msra.mxu0 0.0
    %1069 = vmatprep.subr.mxu0 0.0
    %1070 = vmatpush1.msra.mxu0 0.0
    %1071 = vmatprep.subr.mxu0 0.0
    %1072 = vmatpush1.msra.mxu0 0.0
    %1073 = vmatprep.subr.mxu0 0.0
    %1074 = vmatpush1.msra.mxu0 0.0
    %1075 = vmatprep.subr.mxu0 0.0
    %1076 = vmatpush1.msra.mxu0 0.0
    %1077 = vmatprep.subr.mxu0 0.0
    %1078 = vmatpush1.msra.mxu0 0.0
    %1079 = vmatprep.subr.mxu0 0.0
    %1080 = vmatpush1.msra.mxu0 0.0
    %1081 = vmatprep.subr.mxu0 0.0
    %1082 = vmatpush1.msra.mxu0 0.0
    %1083 = vmatprep.subr.mxu0 0.0
    %1084 = vmatpush1.msra.mxu0 0.0
    %1085 = vmatprep.mubr.f32.mxu0 0.0
    %1086 = vmatmul.mubr.f32.gmra.mrb[0].mxu0 %v1019
    %v1087 = vpop.f32.mrb[0].mxu0
    %v1088 = vadd.f32 %v30, %v1087
    %v1089 = vpop.f32.mrb[0].mxu0
    %1090 = vdwg.mxu0
    %1092 = vrot.lane.b32.xlu0 %v1016, 96
    %v1093 = vpop.permute.xlu0 %1092
    %v1094 = vsel %vm105, %v1093, 0
    %1096 = vmatprep.subr.mxu0 0.0
    %1097 = vmatpush1.msra.mxu0 %v21
    %1098 = vmatprep.subr.mxu0 0.0
    %1099 = vmatpush1.msra.mxu0 %v22
    %1100 = vmatprep.subr.mxu0 0.0
    %1101 = vmatpush1.msra.mxu0 %v23
    %1102 = vmatprep.subr.mxu0 0.0
    %1103 = vmatpush1.msra.mxu0 %v24
    %1104 = vmatprep.subr.mxu0 0.0
    %1105 = vmatpush1.msra.mxu0 0.0
    %1106 = vmatprep.subr.mxu0 0.0
    %1107 = vmatpush1.msra.mxu0 0.0
    %1108 = vmatprep.subr.mxu0 0.0
    %1109 = vmatpush1.msra.mxu0 0.0
    %1110 = vmatprep.subr.mxu0 0.0
    %1111 = vmatpush1.msra.mxu0 0.0
    %1112 = vmatprep.subr.mxu0 0.0
    %1113 = vmatpush1.msra.mxu0 0.0
    %1114 = vmatprep.subr.mxu0 0.0
    %1115 = vmatpush1.msra.mxu0 0.0
    %1116 = vmatprep.subr.mxu0 0.0
    %1117 = vmatpush1.msra.mxu0 0.0
    %1118 = vmatprep.subr.mxu0 0.0
    %1119 = vmatpush1.msra.mxu0 0.0
    %1120 = vmatprep.subr.mxu0 0.0
    %1121 = vmatpush1.msra.mxu0 0.0
    %1122 = vmatprep.subr.mxu0 0.0
    %1123 = vmatpush1.msra.mxu0 0.0
    %1124 = vmatprep.subr.mxu0 0.0
    %1125 = vmatpush1.msra.mxu0 0.0
    %1126 = vmatprep.subr.mxu0 0.0
    %1127 = vmatpush1.msra.mxu0 0.0
    %1128 = vmatprep.subr.mxu0 0.0
    %1129 = vmatpush1.msra.mxu0 0.0
    %1130 = vmatprep.subr.mxu0 0.0
    %1131 = vmatpush1.msra.mxu0 0.0
    %1132 = vmatprep.subr.mxu0 0.0
    %1133 = vmatpush1.msra.mxu0 0.0
    %1134 = vmatprep.subr.mxu0 0.0
    %1135 = vmatpush1.msra.mxu0 0.0
    %1136 = vmatprep.subr.mxu0 0.0
    %1137 = vmatpush1.msra.mxu0 0.0
    %1138 = vmatprep.subr.mxu0 0.0
    %1139 = vmatpush1.msra.mxu0 0.0
    %1140 = vmatprep.subr.mxu0 0.0
    %1141 = vmatpush1.msra.mxu0 0.0
    %1142 = vmatprep.subr.mxu0 0.0
    %1143 = vmatpush1.msra.mxu0 0.0
    %1144 = vmatprep.subr.mxu0 0.0
    %1145 = vmatpush1.msra.mxu0 0.0
    %1146 = vmatprep.subr.mxu0 0.0
    %1147 = vmatpush1.msra.mxu0 0.0
    %1148 = vmatprep.subr.mxu0 0.0
    %1149 = vmatpush1.msra.mxu0 0.0
    %1150 = vmatprep.subr.mxu0 0.0
    %1151 = vmatpush1.msra.mxu0 0.0
    %1152 = vmatprep.subr.mxu0 0.0
    %1153 = vmatpush1.msra.mxu0 0.0
    %1154 = vmatprep.subr.mxu0 0.0
    %1155 = vmatpush1.msra.mxu0 0.0
    %1156 = vmatprep.subr.mxu0 0.0
    %1157 = vmatpush1.msra.mxu0 0.0
    %1158 = vmatprep.subr.mxu0 0.0
    %1159 = vmatpush1.msra.mxu0 0.0
    %1160 = vmatprep.mubr.f32.mxu0 0.0
    %1161 = vmatmul.mubr.f32.gmra.mrb[0].mxu0 %v1094
    %v1162 = vpop.f32.mrb[0].mxu0
    %v1163 = vadd.f32 0.0, %v1162
    %v1164 = vpop.f32.mrb[0].mxu0
    %1165 = vdwg.mxu0
    %1166 = vmatprep.subr.mxu0 0.0
    %1167 = vmatpush1.msra.mxu0 %v188
    %1168 = vmatprep.subr.mxu0 0.0
    %1169 = vmatpush1.msra.mxu0 %v190
    %1170 = vmatprep.subr.mxu0 0.0
    %1171 = vmatpush1.msra.mxu0 %v192
    %1172 = vmatprep.subr.mxu0 0.0
    %1173 = vmatpush1.msra.mxu0 %v194
    %1174 = vmatprep.subr.mxu0 0.0
    %1175 = vmatpush1.msra.mxu0 0.0
    %1176 = vmatprep.subr.mxu0 0.0
    %1177 = vmatpush1.msra.mxu0 0.0
    %1178 = vmatprep.subr.mxu0 0.0
    %1179 = vmatpush1.msra.mxu0 0.0
    %1180 = vmatprep.subr.mxu0 0.0
    %1181 = vmatpush1.msra.mxu0 0.0
    %1182 = vmatprep.subr.mxu0 0.0
    %1183 = vmatpush1.msra.mxu0 0.0
    %1184 = vmatprep.subr.mxu0 0.0
    %1185 = vmatpush1.msra.mxu0 0.0
    %1186 = vmatprep.subr.mxu0 0.0
    %1187 = vmatpush1.msra.mxu0 0.0
    %1188 = vmatprep.subr.mxu0 0.0
    %1189 = vmatpush1.msra.mxu0 0.0
    %1190 = vmatprep.subr.mxu0 0.0
    %1191 = vmatpush1.msra.mxu0 0.0
    %1192 = vmatprep.subr.mxu0 0.0
    %1193 = vmatpush1.msra.mxu0 0.0
    %1194 = vmatprep.subr.mxu0 0.0
    %1195 = vmatpush1.msra.mxu0 0.0
    %1196 = vmatprep.subr.mxu0 0.0
    %1197 = vmatpush1.msra.mxu0 0.0
    %1198 = vmatprep.subr.mxu0 0.0
    %1199 = vmatpush1.msra.mxu0 0.0
    %1200 = vmatprep.subr.mxu0 0.0
    %1201 = vmatpush1.msra.mxu0 0.0
    %1202 = vmatprep.subr.mxu0 0.0
    %1203 = vmatpush1.msra.mxu0 0.0
    %1204 = vmatprep.subr.mxu0 0.0
    %1205 = vmatpush1.msra.mxu0 0.0
    %1206 = vmatprep.subr.mxu0 0.0
    %1207 = vmatpush1.msra.mxu0 0.0
    %1208 = vmatprep.subr.mxu0 0.0
    %1209 = vmatpush1.msra.mxu0 0.0
    %1210 = vmatprep.subr.mxu0 0.0
    %1211 = vmatpush1.msra.mxu0 0.0
    %1212 = vmatprep.subr.mxu0 0.0
    %1213 = vmatpush1.msra.mxu0 0.0
    %1214 = vmatprep.subr.mxu0 0.0
    %1215 = vmatpush1.msra.mxu0 0.0
    %1216 = vmatprep.subr.mxu0 0.0
    %1217 = vmatpush1.msra.mxu0 0.0
    %1218 = vmatprep.subr.mxu0 0.0
    %1219 = vmatpush1.msra.mxu0 0.0
    %1220 = vmatprep.subr.mxu0 0.0
    %1221 = vmatpush1.msra.mxu0 0.0
    %1222 = vmatprep.subr.mxu0 0.0
    %1223 = vmatpush1.msra.mxu0 0.0
    %1224 = vmatprep.subr.mxu0 0.0
    %1225 = vmatpush1.msra.mxu0 0.0
    %1226 = vmatprep.subr.mxu0 0.0
    %1227 = vmatpush1.msra.mxu0 0.0
    %1228 = vmatprep.subr.mxu0 0.0
    %1229 = vmatpush1.msra.mxu0 0.0
    %1230 = vmatprep.mubr.f32.mxu0 0.0
    %1231 = vmatmul.mubr.f32.gmra.mrb[0].mxu0 %v1094
    %v1232 = vpop.f32.mrb[0].mxu0
    %v1233 = vadd.f32 %v182, %v1232
    %v1234 = vpop.f32.mrb[0].mxu0
    %1235 = vdwg.mxu0
    %v1236 = vadd.f32 %v1088, %v1163
    %v1237 = vxor.u32 %v1236, 2147483648
    %v1238 = vmul.f32 %v1237, 1.442695
    %v1239 = vpow.pop %v1238
    %v1240 = vadd.f32 %v1239, 1.0
    %v1241 = vrcp.pop %v1240
    %v1242 = vmul.f32 1.0, %v1241
    %v1243 = vmul.f32 %v1242, %v1233
    %1245 = vrot.lane.b32.xlu0 %v1243, 64
    %v1246 = vpop.permute.xlu0 %1245
    %v1248 = vadd.f32 %v1088, %v1246
    %v1249 = vtanh.pop %v1248
    %v1250 = vsub.f32 1.0, %v1242
    %1252 = vrot.lane.b32.xlu0 %v1249, 96
    %v1253 = vpop.permute.xlu0 %1252
    %v1255 = vmul.f32 %v1250, %v1253
    %v1256 = vmul.f32 %v1242, %v1016
    %v1257 = vadd.f32 %v1255, %v1256
    %1258 = vrot.lane.b32.xlu0 %v17, 48
    %v1259 = vpop.permute.xlu0 %1258
    %v1260 = vsel %vm31, %v1259, 0
    %1262 = vmatprep.subr.mxu0 0.0
    %1263 = vmatpush1.msra.mxu0 %v19
    %1264 = vmatprep.subr.mxu0 0.0
    %1265 = vmatpush1.msra.mxu0 %v20
    %1266 = vmatprep.subr.mxu0 0.0
    %1267 = vmatpush1.msra.mxu0 0.0
    %1268 = vmatprep.subr.mxu0 0.0
    %1269 = vmatpush1.msra.mxu0 0.0
    %1270 = vmatprep.subr.mxu0 0.0
    %1271 = vmatpush1.msra.mxu0 0.0
    %1272 = vmatprep.subr.mxu0 0.0
    %1273 = vmatpush1.msra.mxu0 0.0
    %1274 = vmatprep.subr.mxu0 0.0
    %1275 = vmatpush1.msra.mxu0 0.0
    %1276 = vmatprep.subr.mxu0 0.0
    %1277 = vmatpush1.msra.mxu0 0.0
    %1278 = vmatprep.subr.mxu0 0.0
    %1279 = vmatpush1.msra.mxu0 0.0
    %1280 = vmatprep.subr.mxu0 0.0
    %1281 = vmatpush1.msra.mxu0 0.0
    %1282 = vmatprep.subr.mxu0 0.0
    %1283 = vmatpush1.msra.mxu0 0.0
    %1284 = vmatprep.subr.mxu0 0.0
    %1285 = vmatpush1.msra.mxu0 0.0
    %1286 = vmatprep.subr.mxu0 0.0
    %1287 = vmatpush1.msra.mxu0 0.0
    %1288 = vmatprep.subr.mxu0 0.0
    %1289 = vmatpush1.msra.mxu0 0.0
    %1290 = vmatprep.subr.mxu0 0.0
    %1291 = vmatpush1.msra.mxu0 0.0
    %1292 = vmatprep.subr.mxu0 0.0
    %1293 = vmatpush1.msra.mxu0 0.0
    %1294 = vmatprep.subr.mxu0 0.0
    %1295 = vmatpush1.msra.mxu0 0.0
    %1296 = vmatprep.subr.mxu0 0.0
    %1297 = vmatpush1.msra.mxu0 0.0
    %1298 = vmatprep.subr.mxu0 0.0
    %1299 = vmatpush1.msra.mxu0 0.0
    %1300 = vmatprep.subr.mxu0 0.0
    %1301 = vmatpush1.msra.mxu0 0.0
    %1302 = vmatprep.subr.mxu0 0.0
    %1303 = vmatpush1.msra.mxu0 0.0
    %1304 = vmatprep.subr.mxu0 0.0
    %1305 = vmatpush1.msra.mxu0 0.0
    %1306 = vmatprep.subr.mxu0 0.0
    %1307 = vmatpush1.msra.mxu0 0.0
    %1308 = vmatprep.subr.mxu0 0.0
    %1309 = vmatpush1.msra.mxu0 0.0
    %1310 = vmatprep.subr.mxu0 0.0
    %1311 = vmatpush1.msra.mxu0 0.0
    %1312 = vmatprep.subr.mxu0 0.0
    %1313 = vmatpush1.msra.mxu0 0.0
    %1314 = vmatprep.subr.mxu0 0.0
    %1315 = vmatpush1.msra.mxu0 0.0
    %1316 = vmatprep.subr.mxu0 0.0
    %1317 = vmatpush1.msra.mxu0 0.0
    %1318 = vmatprep.subr.mxu0 0.0
    %1319 = vmatpush1.msra.mxu0 0.0
    %1320 = vmatprep.subr.mxu0 0.0
    %1321 = vmatpush1.msra.mxu0 0.0
    %1322 = vmatprep.subr.mxu0 0.0
    %1323 = vmatpush1.msra.mxu0 0.0
    %1324 = vmatprep.subr.mxu0 0.0
    %1325 = vmatpush1.msra.mxu0 0.0
    %1326 = vmatprep.mubr.f32.mxu0 0.0
    %1327 = vmatmul.mubr.f32.gmra.mrb[0].mxu0 %v1260
    %v1328 = vpop.f32.mrb[0].mxu0
    %v1329 = vadd.f32 %v30, %v1328
    %v1330 = vpop.f32.mrb[0].mxu0
    %1331 = vdwg.mxu0
    %1333 = vrot.lane.b32.xlu0 %v1257, 96
    %v1334 = vpop.permute.xlu0 %1333
    %v1335 = vsel %vm105, %v1334, 0
    %1337 = vmatprep.subr.mxu0 0.0
    %1338 = vmatpush1.msra.mxu0 %v21
    %1339 = vmatprep.subr.mxu0 0.0
    %1340 = vmatpush1.msra.mxu0 %v22
    %1341 = vmatprep.subr.mxu0 0.0
    %1342 = vmatpush1.msra.mxu0 %v23
    %1343 = vmatprep.subr.mxu0 0.0
    %1344 = vmatpush1.msra.mxu0 %v24
    %1345 = vmatprep.subr.mxu0 0.0
    %1346 = vmatpush1.msra.mxu0 0.0
    %1347 = vmatprep.subr.mxu0 0.0
    %1348 = vmatpush1.msra.mxu0 0.0
    %1349 = vmatprep.subr.mxu0 0.0
    %1350 = vmatpush1.msra.mxu0 0.0
    %1351 = vmatprep.subr.mxu0 0.0
    %1352 = vmatpush1.msra.mxu0 0.0
    %1353 = vmatprep.subr.mxu0 0.0
    %1354 = vmatpush1.msra.mxu0 0.0
    %1355 = vmatprep.subr.mxu0 0.0
    %1356 = vmatpush1.msra.mxu0 0.0
    %1357 = vmatprep.subr.mxu0 0.0
    %1358 = vmatpush1.msra.mxu0 0.0
    %1359 = vmatprep.subr.mxu0 0.0
    %1360 = vmatpush1.msra.mxu0 0.0
    %1361 = vmatprep.subr.mxu0 0.0
    %1362 = vmatpush1.msra.mxu0 0.0
    %1363 = vmatprep.subr.mxu0 0.0
    %1364 = vmatpush1.msra.mxu0 0.0
    %1365 = vmatprep.subr.mxu0 0.0
    %1366 = vmatpush1.msra.mxu0 0.0
    %1367 = vmatprep.subr.mxu0 0.0
    %1368 = vmatpush1.msra.mxu0 0.0
    %1369 = vmatprep.subr.mxu0 0.0
    %1370 = vmatpush1.msra.mxu0 0.0
    %1371 = vmatprep.subr.mxu0 0.0
    %1372 = vmatpush1.msra.mxu0 0.0
    %1373 = vmatprep.subr.mxu0 0.0
    %1374 = vmatpush1.msra.mxu0 0.0
    %1375 = vmatprep.subr.mxu0 0.0
    %1376 = vmatpush1.msra.mxu0 0.0
    %1377 = vmatprep.subr.mxu0 0.0
    %1378 = vmatpush1.msra.mxu0 0.0
    %1379 = vmatprep.subr.mxu0 0.0
    %1380 = vmatpush1.msra.mxu0 0.0
    %1381 = vmatprep.subr.mxu0 0.0
    %1382 = vmatpush1.msra.mxu0 0.0
    %1383 = vmatprep.subr.mxu0 0.0
    %1384 = vmatpush1.msra.mxu0 0.0
    %1385 = vmatprep.subr.mxu0 0.0
    %1386 = vmatpush1.msra.mxu0 0.0
    %1387 = vmatprep.subr.mxu0 0.0
    %1388 = vmatpush1.msra.mxu0 0.0
    %1389 = vmatprep.subr.mxu0 0.0
    %1390 = vmatpush1.msra.mxu0 0.0
    %1391 = vmatprep.subr.mxu0 0.0
    %1392 = vmatpush1.msra.mxu0 0.0
    %1393 = vmatprep.subr.mxu0 0.0
    %1394 = vmatpush1.msra.mxu0 0.0
    %1395 = vmatprep.subr.mxu0 0.0
    %1396 = vmatpush1.msra.mxu0 0.0
    %1397 = vmatprep.subr.mxu0 0.0
    %1398 = vmatpush1.msra.mxu0 0.0
    %1399 = vmatprep.subr.mxu0 0.0
    %1400 = vmatpush1.msra.mxu0 0.0
    %1401 = vmatprep.mubr.f32.mxu0 0.0
    %1402 = vmatmul.mubr.f32.gmra.mrb[0].mxu0 %v1335
    %v1403 = vpop.f32.mrb[0].mxu0
    %v1404 = vadd.f32 0.0, %v1403
    %v1405 = vpop.f32.mrb[0].mxu0
    %1406 = vdwg.mxu0
    %1407 = vmatprep.subr.mxu0 0.0
    %1408 = vmatpush1.msra.mxu0 %v188
    %1409 = vmatprep.subr.mxu0 0.0
    %1410 = vmatpush1.msra.mxu0 %v190
    %1411 = vmatprep.subr.mxu0 0.0
    %1412 = vmatpush1.msra.mxu0 %v192
    %1413 = vmatprep.subr.mxu0 0.0
    %1414 = vmatpush1.msra.mxu0 %v194
    %1415 = vmatprep.subr.mxu0 0.0
    %1416 = vmatpush1.msra.mxu0 0.0
    %1417 = vmatprep.subr.mxu0 0.0
    %1418 = vmatpush1.msra.mxu0 0.0
    %1419 = vmatprep.subr.mxu0 0.0
    %1420 = vmatpush1.msra.mxu0 0.0
    %1421 = vmatprep.subr.mxu0 0.0
    %1422 = vmatpush1.msra.mxu0 0.0
    %1423 = vmatprep.subr.mxu0 0.0
    %1424 = vmatpush1.msra.mxu0 0.0
    %1425 = vmatprep.subr.mxu0 0.0
    %1426 = vmatpush1.msra.mxu0 0.0
    %1427 = vmatprep.subr.mxu0 0.0
    %1428 = vmatpush1.msra.mxu0 0.0
    %1429 = vmatprep.subr.mxu0 0.0
    %1430 = vmatpush1.msra.mxu0 0.0
    %1431 = vmatprep.subr.mxu0 0.0
    %1432 = vmatpush1.msra.mxu0 0.0
    %1433 = vmatprep.subr.mxu0 0.0
    %1434 = vmatpush1.msra.mxu0 0.0
    %1435 = vmatprep.subr.mxu0 0.0
    %1436 = vmatpush1.msra.mxu0 0.0
    %1437 = vmatprep.subr.mxu0 0.0
    %1438 = vmatpush1.msra.mxu0 0.0
    %1439 = vmatprep.subr.mxu0 0.0
    %1440 = vmatpush1.msra.mxu0 0.0
    %1441 = vmatprep.subr.mxu0 0.0
    %1442 = vmatpush1.msra.mxu0 0.0
    %1443 = vmatprep.subr.mxu0 0.0
    %1444 = vmatpush1.msra.mxu0 0.0
    %1445 = vmatprep.subr.mxu0 0.0
    %1446 = vmatpush1.msra.mxu0 0.0
    %1447 = vmatprep.subr.mxu0 0.0
    %1448 = vmatpush1.msra.mxu0 0.0
    %1449 = vmatprep.subr.mxu0 0.0
    %1450 = vmatpush1.msra.mxu0 0.0
    %1451 = vmatprep.subr.mxu0 0.0
    %1452 = vmatpush1.msra.mxu0 0.0
    %1453 = vmatprep.subr.mxu0 0.0
    %1454 = vmatpush1.msra.mxu0 0.0
    %1455 = vmatprep.subr.mxu0 0.0
    %1456 = vmatpush1.msra.mxu0 0.0
    %1457 = vmatprep.subr.mxu0 0.0
    %1458 = vmatpush1.msra.mxu0 0.0
    %1459 = vmatprep.subr.mxu0 0.0
    %1460 = vmatpush1.msra.mxu0 0.0
    %1461 = vmatprep.subr.mxu0 0.0
    %1462 = vmatpush1.msra.mxu0 0.0
    %1463 = vmatprep.subr.mxu0 0.0
    %1464 = vmatpush1.msra.mxu0 0.0
    %1465 = vmatprep.subr.mxu0 0.0
    %1466 = vmatpush1.msra.mxu0 0.0
    %1467 = vmatprep.subr.mxu0 0.0
    %1468 = vmatpush1.msra.mxu0 0.0
    %1469 = vmatprep.subr.mxu0 0.0
    %1470 = vmatpush1.msra.mxu0 0.0
    %1471 = vmatprep.mubr.f32.mxu0 0.0
    %1472 = vmatmul.mubr.f32.gmra.mrb[0].mxu0 %v1335
    %v1473 = vpop.f32.mrb[0].mxu0
    %v1474 = vadd.f32 %v182, %v1473
    %v1475 = vpop.f32.mrb[0].mxu0
    %1476 = vdwg.mxu0
    %v1477 = vadd.f32 %v1329, %v1404
    %v1478 = vxor.u32 %v1477, 2147483648
    %v1479 = vmul.f32 %v1478, 1.442695
    %v1480 = vpow.pop %v1479
    %v1481 = vadd.f32 %v1480, 1.0
    %v1482 = vrcp.pop %v1481
    %v1483 = vmul.f32 1.0, %v1482
    %v1484 = vmul.f32 %v1483, %v1474
    %1486 = vrot.lane.b32.xlu0 %v1484, 64
    %v1487 = vpop.permute.xlu0 %1486
    %v1489 = vadd.f32 %v1329, %v1487
    %v1490 = vtanh.pop %v1489
    %v1491 = vsub.f32 1.0, %v1483
    %1493 = vrot.lane.b32.xlu0 %v1490, 96
    %v1494 = vpop.permute.xlu0 %1493
    %v1496 = vmul.f32 %v1491, %v1494
    %v1497 = vmul.f32 %v1483, %v1257
    %v1498 = vadd.f32 %v1496, %v1497
    %1500 = vrot.lane.b32.xlu0 %v775, 32
    %v1501 = vpop.permute.xlu0 %1500
    %1503 = vrot.lane.b32.xlu0 %v1016, 64
    %v1504 = vpop.permute.xlu0 %1503
    %v1507 = vsel %vm105, %v370, %v534
    %vm1508 = vcmask 523264
    %v1509 = vsel %vm1508, %v1507, %v1501
    %vm1510 = vcmask 785408
    %v1511 = vsel %vm1510, %v1509, %v1504
    %v1512 = vsel %vm105, %v1334, %v1498
    %1513 = vst [vmem:[%s3] sm:$0xff] %v1511
    %1514 = vst.msk [vmem:[%s3 + $0x8] sm:$0xff] %vm1508, %v1512
    %1516 = vrot.lane.b32.xlu0 %v1498, 96
    %v1517 = vpop.permute.xlu0 %1516
    %1518 = vrot.lane.b32.xlu0 %v21, 32
    %v1519 = vpop.permute.xlu0 %1518
    %1520 = vrot.lane.b32.xlu0 %v22, 32
    %v1521 = vpop.permute.xlu0 %1520
    %1522 = vrot.lane.b32.xlu0 %v23, 32
    %v1523 = vpop.permute.xlu0 %1522
    %1524 = vrot.lane.b32.xlu0 %v24, 32
    %v1525 = vpop.permute.xlu0 %1524
    %1531 = vrot.lane.b32.xlu0 %v30, 32
    %v1532 = vpop.permute.xlu0 %1531
    %v1534 = vsel %vm105, %v1517, 0
    %1536 = vmatprep.subr.mxu0 0.0
    %1537 = vmatpush1.msra.mxu0 %v1519
    %1538 = vmatprep.subr.mxu0 0.0
    %1539 = vmatpush1.msra.mxu0 %v1521
    %1540 = vmatprep.subr.mxu0 0.0
    %1541 = vmatpush1.msra.mxu0 %v1523
    %1542 = vmatprep.subr.mxu0 0.0
    %1543 = vmatpush1.msra.mxu0 %v1525
    %1544 = vmatprep.subr.mxu0 0.0
    %1545 = vmatpush1.msra.mxu0 0.0
    %1546 = vmatprep.subr.mxu0 0.0
    %1547 = vmatpush1.msra.mxu0 0.0
    %1548 = vmatprep.subr.mxu0 0.0
    %1549 = vmatpush1.msra.mxu0 0.0
    %1550 = vmatprep.subr.mxu0 0.0
    %1551 = vmatpush1.msra.mxu0 0.0
    %1552 = vmatprep.subr.mxu0 0.0
    %1553 = vmatpush1.msra.mxu0 0.0
    %1554 = vmatprep.subr.mxu0 0.0
    %1555 = vmatpush1.msra.mxu0 0.0
    %1556 = vmatprep.subr.mxu0 0.0
    %1557 = vmatpush1.msra.mxu0 0.0
    %1558 = vmatprep.subr.mxu0 0.0
    %1559 = vmatpush1.msra.mxu0 0.0
    %1560 = vmatprep.subr.mxu0 0.0
    %1561 = vmatpush1.msra.mxu0 0.0
    %1562 = vmatprep.subr.mxu0 0.0
    %1563 = vmatpush1.msra.mxu0 0.0
    %1564 = vmatprep.subr.mxu0 0.0
    %1565 = vmatpush1.msra.mxu0 0.0
    %1566 = vmatprep.subr.mxu0 0.0
    %1567 = vmatpush1.msra.mxu0 0.0
    %1568 = vmatprep.subr.mxu0 0.0
    %1569 = vmatpush1.msra.mxu0 0.0
    %1570 = vmatprep.subr.mxu0 0.0
    %1571 = vmatpush1.msra.mxu0 0.0
    %1572 = vmatprep.subr.mxu0 0.0
    %1573 = vmatpush1.msra.mxu0 0.0
    %1574 = vmatprep.subr.mxu0 0.0
    %1575 = vmatpush1.msra.mxu0 0.0
    %1576 = vmatprep.subr.mxu0 0.0
    %1577 = vmatpush1.msra.mxu0 0.0
    %1578 = vmatprep.subr.mxu0 0.0
    %1579 = vmatpush1.msra.mxu0 0.0
    %1580 = vmatprep.subr.mxu0 0.0
    %1581 = vmatpush1.msra.mxu0 0.0
    %1582 = vmatprep.subr.mxu0 0.0
    %1583 = vmatpush1.msra.mxu0 0.0
    %1584 = vmatprep.subr.mxu0 0.0
    %1585 = vmatpush1.msra.mxu0 0.0
    %1586 = vmatprep.subr.mxu0 0.0
    %1587 = vmatpush1.msra.mxu0 0.0
    %1588 = vmatprep.subr.mxu0 0.0
    %1589 = vmatpush1.msra.mxu0 0.0
    %1590 = vmatprep.subr.mxu0 0.0
    %1591 = vmatpush1.msra.mxu0 0.0
    %1592 = vmatprep.subr.mxu0 0.0
    %1593 = vmatpush1.msra.mxu0 0.0
    %1594 = vmatprep.subr.mxu0 0.0
    %1595 = vmatpush1.msra.mxu0 0.0
    %1596 = vmatprep.subr.mxu0 0.0
    %1597 = vmatpush1.msra.mxu0 0.0
    %1598 = vmatprep.subr.mxu0 0.0
    %1599 = vmatpush1.msra.mxu0 0.0
    %1600 = vmatprep.mubr.f32.mxu0 0.0
    %1601 = vmatmul.mubr.f32.gmra.mrb[0].mxu0 %v1534
    %v1602 = vpop.f32.mrb[0].mxu0
    %v1603 = vadd.f32 %v1532, %v1602
    %v1604 = vpop.f32.mrb[0].mxu0
    %1605 = vdwg.mxu0
    %1606 = vst.msk [vmem:[#allocation2] sm:$0xff] %vm31, %v1603
    // Predicated region
    $region14: #{motion_model_forward.1} parent=1 // pred_check
      _
    $region15: #{motion_model_forward.1} parent=1 // pred_check_branch
      %1608 = sbr.rel (0) target = $region17
    $region16: #{motion_model_forward.1} parent=1 // pred_region
      _
    $region17: #{motion_model_forward.1} parent=1 // pred_fallthru
      _
    // Predicated region
    $region18: #{motion_model_forward.1} parent=1 // pred_check
      _
    $region19: #{motion_model_forward.1} parent=1 // pred_check_branch
      %1610 = sbr.rel (0) target = $region21
    $region20: #{motion_model_forward.1} parent=1 // pred_region
      %s1612 = ssub.s32 128, 128
      %1613 = vsyncadd [#allocation3], %s1612
      %s1615 = sshll.u32 [#allocation2], 4
      %s1616 = int_to_ptr.vmem [resolvable:$true] %s1615
      %1618 = dma.vmem_to_hbm [thread:$0]  %s1616, 128, %s4, [#allocation3]
    $region21: #{motion_model_forward.1} parent=1 // pred_fallthru
      _
    // Predicated region
    $region22: #{motion_model_forward.1} parent=1 // pred_check
      _
    $region23: #{motion_model_forward.1} parent=1 // pred_check_branch
      %1620 = sbr.rel (0) target = $region25
    $region24: #{motion_model_forward.1} parent=1 // pred_region
      _
    $region25: #{motion_model_forward.1} parent=1 // pred_fallthru
      _
    // Predicated region
    $region26: #{motion_model_forward.1} parent=1 // pred_check
      _
    $region27: #{motion_model_forward.1} parent=1 // pred_check_branch
      %1622 = sbr.rel (0) target = $region29
    $region28: #{motion_model_forward.1} parent=1 // pred_region
      %1623 = dma.done [#allocation3], 128
    $region29: #{motion_model_forward.1} parent=1 // pred_fallthru
      _
    %1624 = vsyncpa [#allocation3], 1

</llo_original>
